<compile_context>
chip_gen: v5e
topology: v5e:2x2
jax: 0.10.0
libtpu: 0.0.40
codegen_flags: <defaults>
</compile_context>

<pallas_src>
from functools import partial

import jax
import jax.numpy as jnp
from jax import lax
from jax.experimental import pallas as pl
from jax.experimental.pallas import tpu as pltpu

ALPHA = 0.6      # Boundary_Diceloss mixing weight
BETA = 0.75      # Tversky beta (BoundaryLoss)
SMOOTH = 1.0     # DiceLoss smooth

K_LIVE_F32_TEMPS = 12   # conservative count of live block-sized f32 intermediates


# --------------------------------------------------------------------------- #
# Kernel
# --------------------------------------------------------------------------- #
def _make_partial_sums_kernel(C, TC, HW, W, ragged, use_xlu_roll):
    """Kernel over one (sample, channel-tile) block of the flattened inputs.

    Block shapes: edge (4, HW) f32, pred/gt (1, TC, HW), out (1, 8, 128) f32.
    Emits 6 partial sums per block into lanes 0..5 and accumulates them over
    the channel grid axis (output block stays resident).
    """
    n_elems = float(TC * HW)

    def wrap_shift(x, s):
        # Circular shift along the flattened spatial axis: out[i] = x[(i - s) % HW].
        s = s % HW
        if s == 0:
            return x
        if use_xlu_roll:
            return pltpu.roll(x, s, 1)     # XLU lane rotation, no relayout copies
        # Fallback: concatenate of lane slices (always lowers, but materializes copies).
        return jnp.concatenate([x[:, HW - s:], x[:, :HW - s]], axis=1)

    def kernel(edge_ref, pred_ref, gt_ref, out_ref):
        c_step = pl.program_id(1)

        pred = pred_ref[0].astype(jnp.float32)        # (TC, HW) logits, f32 compute
        gt = gt_ref[0].astype(jnp.float32)            # (TC, HW) targets, f32 compute

        if ragged:
            # Tail block: zero the channels beyond C (padded-block garbage), and
            # track the true element count so sum(p) stays exact.
            ch = lax.broadcasted_iota(jnp.int32, (TC, HW), 0)
            valid = (c_step * TC + ch) < C
            pred = jnp.where(valid, pred, 0.0)        # -> sigmoid == 0.5 exactly
            gt = jnp.where(valid, gt, 0.0)
            n_valid = jnp.minimum(C - c_step * TC, TC).astype(jnp.float32) * HW
        else:
            n_valid = jnp.float32(n_elems)

        # Edge-of-image masks (1.0 on first/last column/row of every image),
        # broadcast from the tiny (1, HW) rows to the full block.
        def edge(i):
            return jnp.broadcast_to(edge_ref[i:i + 1, :], (TC, HW)) > 0.0

        w_first, w_last, h_first, h_last = edge(0), edge(1), edge(2), edge(3)

        def pool3x3(x, op):
            # Separable 3x3 stride-1 SAME pool with edge replication (exact for
            # max/min because the centre tap is always inside the valid window).
            left = jnp.where(w_first, x, wrap_shift(x, 1))      # x[h, w-1]
            right = jnp.where(w_last, x, wrap_shift(x, -1))     # x[h, w+1]
            m = op(x, op(left, right))
            up = jnp.where(h_first, m, wrap_shift(m, W))        # m[h-1, w]
            down = jnp.where(h_last, m, wrap_shift(m, -W))      # m[h+1, w]
            return op(m, op(up, down))

        one_m_p = 0.5 - 0.5 * jnp.tanh(0.5 * pred)              # = 1 - sigmoid(pred)
        pred_b = pool3x3(one_m_p, jnp.maximum) - one_m_p        # boundary of sigmoid(pred)
        gt_b = gt - pool3x3(gt, jnp.minimum)                    # == maxpool(1-gt) - (1-gt)

        # Boundary (Tversky) partials; fp / fn are recovered algebraically outside.
        tp = jnp.sum(gt_b * pred_b)
        s_pred_b = jnp.sum(pred_b)
        s_gt_b = jnp.sum(gt_b)

        # Dice partials; p = 1 - one_m_p is never materialized.  Masked-out
        # channels contribute exactly 0.5 per element to sum(one_m_p) and are
        # removed by the n_valid correction.
        s_gt = jnp.sum(gt)
        s_p_gt = s_gt - jnp.sum(one_m_p * gt)                           # = sum(p * gt)
        s_p = n_elems - jnp.sum(one_m_p) - 0.5 * (n_elems - n_valid)    # = sum(p)

        # Pack the 6 per-block scalars into lanes 0..5 of an (8, 128) tile.
        lane = lax.broadcasted_iota(jnp.int32, (8, 128), 1)
        packed = (jnp.where(lane == 0, tp, 0.0)
                  + jnp.where(lane == 1, s_pred_b, 0.0)
                  + jnp.where(lane == 2, s_gt_b, 0.0)
                  + jnp.where(lane == 3, s_p_gt, 0.0)
                  + jnp.where(lane == 4, s_p, 0.0)
                  + jnp.where(lane == 5, s_gt, 0.0))

        # Accumulate over the channel-tile grid axis (output block stays resident).
        @pl.when(c_step == 0)
        def _init():
            out_ref[0] = packed

        @pl.when(c_step > 0)
        def _accumulate():
            out_ref[0] += packed

    return kernel


# --------------------------------------------------------------------------- #
# Tiling / VMEM budgeting
# --------------------------------------------------------------------------- #
def _vmem_limit_bytes():
    """Scoped-VMEM limit: <= 75% of physical per-core VMEM, capped at 96 MiB."""
    try:
        phys = int(pltpu.get_tpu_info().vmem_capacity_bytes)
    except Exception:
        phys = 64 * 1024 * 1024      # v7x per-TensorCore VMEM (smallest current part)
    return min(int(phys * 0.75), 96 * 1024 * 1024)


def _pick_channel_tile(C, HW, in_bytes_per_elem, vmem_limit, max_channel_tile=None):
    """Largest channel tile whose block (2x double-buffered inputs + live f32
    intermediates) fits the VMEM budget; sublane dim kept a multiple of 8 or == C."""
    per_channel = HW * (2 * in_bytes_per_elem + 4 * K_LIVE_F32_TEMPS)
    cap = max(1, int(vmem_limit * 0.85) // per_channel)
    if max_channel_tile is not None:
        cap = min(cap, max_channel_tile)
    if cap >= C:
        return C
    aligned = (cap // 8) * 8
    if aligned == 0:
        return cap                        # see spatial-tiling TODO above
    steps = -(-C // aligned)
    # Prefer an exact divisor of C (skips in-kernel tail masking) when it costs
    # no extra grid steps.
    for tc in range(aligned, 7, -8):
        if C % tc == 0 and -(-C // tc) == steps:
            return tc
    return aligned


# --------------------------------------------------------------------------- #
# Wrapper
# --------------------------------------------------------------------------- #
@partial(jax.jit, static_argnames=("max_channel_tile", "use_xlu_roll"))
def _boundary_dice_impl(logits, targets, *, max_channel_tile=None, use_xlu_roll=True):
    assert logits.shape == targets.shape, "pred and mask should have the same shape."
    N, C, H, W = logits.shape
    HW = H * W

    # Lossless narrowing of integer / bool masks (kernel upcasts to f32).
    if jnp.issubdtype(targets.dtype, jnp.integer) or targets.dtype == jnp.bool_:
        targets = targets.astype(jnp.int8)

    # Lane-dense layout: collapse (H, W) -> H*W (free row-major reshape in XLA).
    pred2 = logits.reshape(N, C, HW)
    gt2 = targets.reshape(N, C, HW)

    # Edge-of-image masks for the 3x3 pool's replication fix-up (tiny, computed once).
    idx = jnp.arange(HW, dtype=jnp.int32)
    col = idx % W
    row = idx // W
    edge = jnp.stack([col == 0, col == W - 1, row == 0, row == H - 1]).astype(jnp.float32)

    vmem_limit = _vmem_limit_bytes()
    in_bytes = pred2.dtype.itemsize + gt2.dtype.itemsize
    TC = _pick_channel_tile(C, HW, in_bytes, vmem_limit, max_channel_tile)
    c_steps = -(-C // TC)
    ragged = (C % TC) != 0

    kernel = _make_partial_sums_kernel(C, TC, HW, W, ragged, use_xlu_roll)

    sums = pl.pallas_call(
        kernel,
        out_shape=jax.ShapeDtypeStruct((N, 8, 128), jnp.float32),
        grid=(N, c_steps),
        in_specs=[
            pl.BlockSpec((4, HW), lambda n, c: (0, 0)),           # edge masks (resident)
            pl.BlockSpec((1, TC, HW), lambda n, c: (n, c, 0)),    # logits
            pl.BlockSpec((1, TC, HW), lambda n, c: (n, c, 0)),    # targets
        ],
        out_specs=pl.BlockSpec((1, 8, 128), lambda n, c: (n, 0, 0)),
        compiler_params=pltpu.CompilerParams(
            dimension_semantics=("parallel", "arbitrary"),
            vmem_limit_bytes=vmem_limit,
        ),
        cost_estimate=pl.CostEstimate(
            flops=30 * N * C * HW,
            transcendentals=N * C * HW,
            bytes_accessed=N * C * HW * in_bytes + N * 8 * 128 * 4 + 4 * HW * 4,
        ),
    )(edge, pred2, gt2)

    tp = sums[:, 0, 0]
    s_pred_b = sums[:, 0, 1]
    s_gt_b = sums[:, 0, 2]
    s_p_gt = sums[:, 0, 3]
    s_p = sums[:, 0, 4]
    s_gt = sums[:, 0, 5]

    # BoundaryLoss: per-sample Tversky over the boundary maps (no denominator
    # smoothing, matching the PyTorch reference exactly).
    fp = s_pred_b - tp
    fn = s_gt_b - tp
    boundary = 1.0 - jnp.sum(tp / (tp + BETA * fn + (1.0 - BETA) * fp)) / N

    # DiceLoss: global sums over the whole batch.
    intersection = jnp.sum(s_p_gt)
    union = jnp.sum(s_p) + jnp.sum(s_gt)
    dice = 1.0 - (2.0 * intersection + SMOOTH) / (union + SMOOTH)

    return ALPHA * dice + (1.0 - ALPHA) * boundary


def boundary_dice_loss(logits, targets, max_channel_tile=None):
    """Pallas implementation of Boundary_Diceloss.forward (tensor branch)."""
    try:
        return _boundary_dice_impl(logits, targets,
                                   max_channel_tile=max_channel_tile,
                                   use_xlu_roll=True)
    except Exception:
        # pltpu.roll failed to lower for this shape -> retry with the
        # concatenate-based shift fallback (always lowers).
        return _boundary_dice_impl(logits, targets,
                                   max_channel_tile=max_channel_tile,
                                   use_xlu_roll=False)


# --------------------------------------------------------------------------- #
# Pure-JAX reference (mirror of the PyTorch module)
# --------------------------------------------------------------------------- #
def _boundary_dice_loss_ref(logits, targets):
    p = jax.nn.sigmoid(logits)
    gt = targets.astype(jnp.float32)

    def max_pool_same(x):
        return lax.reduce_window(
            x, -jnp.inf, lax.max,
            window_dimensions=(1, 1, 3, 3),
            window_strides=(1, 1, 1, 1),
            padding=((0, 0), (0, 0), (1, 1), (1, 1)))

    gt_b = max_pool_same(1.0 - gt) - (1.0 - gt)
    pred_b = max_pool_same(1.0 - p) - (1.0 - p)

    N = logits.shape[0]
    gt_b2 = gt_b.reshape(N, -1)
    pred_b2 = pred_b.reshape(N, -1)
    tp = jnp.sum(gt_b2 * pred_b2, axis=1)
    fp = jnp.sum((1.0 - gt_b2) * pred_b2, axis=1)
    fn = jnp.sum(gt_b2 * (1.0 - pred_b2), axis=1)
    boundary = 1.0 - jnp.sum(tp / (tp + BETA * fn + (1.0 - BETA) * fp)) / N

    intersection = jnp.sum(p * gt)
    union = jnp.sum(p) + jnp.sum(gt)
    dice = 1.0 - (2.0 * intersection + SMOOTH) / (union + SMOOTH)
    return ALPHA * dice + (1.0 - ALPHA) * boundary


if __name__ == "__main__":
    key = jax.random.PRNGKey(0)
    k1, k2, k3, k4 = jax.random.split(key, 4)

    # Primary check: f32 logits, binary f32 targets, channel dim fits one block.
    N, C, H, W = 2, 4, 16, 16
    logits = jax.random.normal(k1, (N, C, H, W), dtype=jnp.float32)
    targets = (jax.random.uniform(k2, (N, C, H, W)) > 0.5).astype(jnp.float32)

    out = jax.block_until_ready(boundary_dice_loss(logits, targets))
    ref = _boundary_dice_loss_ref(logits, targets)
    assert jnp.allclose(out, ref, atol=5e-5, rtol=5e-5), (out, ref)

    # Secondary check: ragged channel tiling (C % TC != 0) + int8-narrowed targets.
    N2, C2 = 1, 12
    logits2 = jax.random.normal(k3, (N2, C2, H, W), dtype=jnp.float32)
    targets2 = (jax.random.uniform(k4, (N2, C2, H, W)) > 0.5).astype(jnp.float32)

    out2 = jax.block_until_ready(
        boundary_dice_loss(logits2, targets2.astype(jnp.int8), max_channel_tile=8))
    ref2 = _boundary_dice_loss_ref(logits2, targets2)
    assert jnp.allclose(out2, ref2, atol=5e-5, rtol=5e-5), (out2, ref2)

    print("KERNEL_OK")
</pallas_src>

<mosaic_0001>
module attributes {stable_mosaic.version = 11 : i64} {
  func.func @kernel(%arg0: i32, %arg1: i32, %arg2: memref<4x256xf32, #tpu.memory_space<vmem>>, %arg3: memref<1x4x256xf32, #tpu.memory_space<vmem>>, %arg4: memref<1x4x256xf32, #tpu.memory_space<vmem>>, %arg5: memref<1x8x128xf32, #tpu.memory_space<vmem>>) attributes {dimension_semantics = [#tpu.dimension_semantics<parallel>, #tpu.dimension_semantics<arbitrary>], iteration_bounds = array<i64: 2, 1>, scalar_prefetch = 0 : i64, scratch_operands = 0 : i64, tpu.core_type = #tpu.core_type<tc>, window_params = [{pipeline_mode = #tpu.pipeline_mode<synchronous>, transform_indices = @transform_0, window_bounds = array<i64: 4, 256>}, {transform_indices = @transform_1, window_bounds = array<i64: 1, 4, 256>}, {transform_indices = @transform_2, window_bounds = array<i64: 1, 4, 256>}, {transform_indices = @transform_3, window_bounds = array<i64: 1, 8, 128>}]} {
    %c0 = arith.constant 0 : index
    %c0_0 = arith.constant 0 : index
    %c0_1 = arith.constant 0 : index
    %0 = vector.load %arg3[%c0, %c0_0, %c0_1] : memref<1x4x256xf32, #tpu.memory_space<vmem>>, vector<1x4x256xf32>
    %1 = vector.shape_cast %0 : vector<1x4x256xf32> to vector<4x256xf32>
    %c0_2 = arith.constant 0 : index
    %c0_3 = arith.constant 0 : index
    %c0_4 = arith.constant 0 : index
    %2 = vector.load %arg4[%c0_2, %c0_3, %c0_4] : memref<1x4x256xf32, #tpu.memory_space<vmem>>, vector<1x4x256xf32>
    %3 = vector.shape_cast %2 : vector<1x4x256xf32> to vector<4x256xf32>
    %c0_5 = arith.constant 0 : index
    %c0_6 = arith.constant 0 : index
    %4 = vector.load %arg2[%c0_5, %c0_6] : memref<4x256xf32, #tpu.memory_space<vmem>>, vector<1x256xf32>
    %5 = vector.shape_cast %4 : vector<1x256xf32> to vector<1x256xf32>
    %6 = vector.broadcast %5 : vector<1x256xf32> to vector<4x256xf32>
    %cst = arith.constant 0.000000e+00 : f32
    %7 = vector.broadcast %cst : f32 to vector<4x256xf32>
    %8 = arith.cmpf ogt, %6, %7 : vector<4x256xf32>
    %c1 = arith.constant 1 : index
    %c0_7 = arith.constant 0 : index
    %9 = vector.load %arg2[%c1, %c0_7] : memref<4x256xf32, #tpu.memory_space<vmem>>, vector<1x256xf32>
    %10 = vector.shape_cast %9 : vector<1x256xf32> to vector<1x256xf32>
    %11 = vector.broadcast %10 : vector<1x256xf32> to vector<4x256xf32>
    %cst_8 = arith.constant 0.000000e+00 : f32
    %12 = vector.broadcast %cst_8 : f32 to vector<4x256xf32>
    %13 = arith.cmpf ogt, %11, %12 : vector<4x256xf32>
    %c2 = arith.constant 2 : index
    %c0_9 = arith.constant 0 : index
    %14 = vector.load %arg2[%c2, %c0_9] : memref<4x256xf32, #tpu.memory_space<vmem>>, vector<1x256xf32>
    %15 = vector.shape_cast %14 : vector<1x256xf32> to vector<1x256xf32>
    %16 = vector.broadcast %15 : vector<1x256xf32> to vector<4x256xf32>
    %cst_10 = arith.constant 0.000000e+00 : f32
    %17 = vector.broadcast %cst_10 : f32 to vector<4x256xf32>
    %18 = arith.cmpf ogt, %16, %17 : vector<4x256xf32>
    %c3 = arith.constant 3 : index
    %c0_11 = arith.constant 0 : index
    %19 = vector.load %arg2[%c3, %c0_11] : memref<4x256xf32, #tpu.memory_space<vmem>>, vector<1x256xf32>
    %20 = vector.shape_cast %19 : vector<1x256xf32> to vector<1x256xf32>
    %21 = vector.broadcast %20 : vector<1x256xf32> to vector<4x256xf32>
    %cst_12 = arith.constant 0.000000e+00 : f32
    %22 = vector.broadcast %cst_12 : f32 to vector<4x256xf32>
    %23 = arith.cmpf ogt, %21, %22 : vector<4x256xf32>
    %cst_13 = arith.constant 5.000000e-01 : f32
    %24 = vector.broadcast %cst_13 : f32 to vector<4x256xf32>
    %25 = arith.mulf %24, %1 : vector<4x256xf32>
    %26 = math.tanh %25 : vector<4x256xf32>
    %cst_14 = arith.constant 5.000000e-01 : f32
    %27 = vector.broadcast %cst_14 : f32 to vector<4x256xf32>
    %28 = arith.mulf %27, %26 : vector<4x256xf32>
    %cst_15 = arith.constant 5.000000e-01 : f32
    %29 = vector.broadcast %cst_15 : f32 to vector<4x256xf32>
    %30 = arith.subf %29, %28 : vector<4x256xf32>
    %c1_i32 = arith.constant 1 : i32
    %31 = tpu.dynamic_rotate %30 by %c1_i32 dim 1 : vector<4x256xf32>, i32 -> vector<4x256xf32>
    %32 = arith.select %8, %30, %31 : vector<4x256xi1>, vector<4x256xf32>
    %c255_i32 = arith.constant 255 : i32
    %33 = tpu.dynamic_rotate %30 by %c255_i32 dim 1 : vector<4x256xf32>, i32 -> vector<4x256xf32>
    %34 = arith.select %13, %30, %33 : vector<4x256xi1>, vector<4x256xf32>
    %35 = arith.maximumf %32, %34 : vector<4x256xf32>
    %36 = arith.maximumf %30, %35 : vector<4x256xf32>
    %c16_i32 = arith.constant 16 : i32
    %37 = tpu.dynamic_rotate %36 by %c16_i32 dim 1 : vector<4x256xf32>, i32 -> vector<4x256xf32>
    %38 = arith.select %18, %36, %37 : vector<4x256xi1>, vector<4x256xf32>
    %c240_i32 = arith.constant 240 : i32
    %39 = tpu.dynamic_rotate %36 by %c240_i32 dim 1 : vector<4x256xf32>, i32 -> vector<4x256xf32>
    %40 = arith.select %23, %36, %39 : vector<4x256xi1>, vector<4x256xf32>
    %41 = arith.maximumf %38, %40 : vector<4x256xf32>
    %42 = arith.maximumf %36, %41 : vector<4x256xf32>
    %43 = arith.subf %42, %30 : vector<4x256xf32>
    %c1_i32_16 = arith.constant 1 : i32
    %44 = tpu.dynamic_rotate %3 by %c1_i32_16 dim 1 : vector<4x256xf32>, i32 -> vector<4x256xf32>
    %45 = arith.select %8, %3, %44 : vector<4x256xi1>, vector<4x256xf32>
    %c255_i32_17 = arith.constant 255 : i32
    %46 = tpu.dynamic_rotate %3 by %c255_i32_17 dim 1 : vector<4x256xf32>, i32 -> vector<4x256xf32>
    %47 = arith.select %13, %3, %46 : vector<4x256xi1>, vector<4x256xf32>
    %48 = arith.minimumf %45, %47 : vector<4x256xf32>
    %49 = arith.minimumf %3, %48 : vector<4x256xf32>
    %c16_i32_18 = arith.constant 16 : i32
    %50 = tpu.dynamic_rotate %49 by %c16_i32_18 dim 1 : vector<4x256xf32>, i32 -> vector<4x256xf32>
    %51 = arith.select %18, %49, %50 : vector<4x256xi1>, vector<4x256xf32>
    %c240_i32_19 = arith.constant 240 : i32
    %52 = tpu.dynamic_rotate %49 by %c240_i32_19 dim 1 : vector<4x256xf32>, i32 -> vector<4x256xf32>
    %53 = arith.select %23, %49, %52 : vector<4x256xi1>, vector<4x256xf32>
    %54 = arith.minimumf %51, %53 : vector<4x256xf32>
    %55 = arith.minimumf %49, %54 : vector<4x256xf32>
    %56 = arith.subf %3, %55 : vector<4x256xf32>
    %57 = arith.mulf %56, %43 : vector<4x256xf32>
    %58 = vector.shape_cast %57 : vector<4x256xf32> to vector<1x4x256xf32>
    %cst_20 = arith.constant dense<0.000000e+00> : vector<1xf32>
    %59 = vector.multi_reduction <add>, %58, %cst_20 [1, 2] : vector<1x4x256xf32> to vector<1xf32>
    %60 = vector.shape_cast %59 : vector<1xf32> to vector<1x1x1xf32>
    %61 = vector.extract %60[0, 0, 0] : f32 from vector<1x1x1xf32>
    %62 = vector.shape_cast %43 : vector<4x256xf32> to vector<1x4x256xf32>
    %cst_21 = arith.constant dense<0.000000e+00> : vector<1xf32>
    %63 = vector.multi_reduction <add>, %62, %cst_21 [1, 2] : vector<1x4x256xf32> to vector<1xf32>
    %64 = vector.shape_cast %63 : vector<1xf32> to vector<1x1x1xf32>
    %65 = vector.extract %64[0, 0, 0] : f32 from vector<1x1x1xf32>
    %66 = vector.shape_cast %56 : vector<4x256xf32> to vector<1x4x256xf32>
    %cst_22 = arith.constant dense<0.000000e+00> : vector<1xf32>
    %67 = vector.multi_reduction <add>, %66, %cst_22 [1, 2] : vector<1x4x256xf32> to vector<1xf32>
    %68 = vector.shape_cast %67 : vector<1xf32> to vector<1x1x1xf32>
    %69 = vector.extract %68[0, 0, 0] : f32 from vector<1x1x1xf32>
    %70 = vector.shape_cast %3 : vector<4x256xf32> to vector<1x4x256xf32>
    %cst_23 = arith.constant dense<0.000000e+00> : vector<1xf32>
    %71 = vector.multi_reduction <add>, %70, %cst_23 [1, 2] : vector<1x4x256xf32> to vector<1xf32>
    %72 = vector.shape_cast %71 : vector<1xf32> to vector<1x1x1xf32>
    %73 = vector.extract %72[0, 0, 0] : f32 from vector<1x1x1xf32>
    %74 = arith.mulf %30, %3 : vector<4x256xf32>
    %75 = vector.shape_cast %74 : vector<4x256xf32> to vector<1x4x256xf32>
    %cst_24 = arith.constant dense<0.000000e+00> : vector<1xf32>
    %76 = vector.multi_reduction <add>, %75, %cst_24 [1, 2] : vector<1x4x256xf32> to vector<1xf32>
    %77 = vector.shape_cast %76 : vector<1xf32> to vector<1x1x1xf32>
    %78 = vector.extract %77[0, 0, 0] : f32 from vector<1x1x1xf32>
    %79 = arith.subf %73, %78 : f32
    %80 = vector.shape_cast %30 : vector<4x256xf32> to vector<1x4x256xf32>
    %cst_25 = arith.constant dense<0.000000e+00> : vector<1xf32>
    %81 = vector.multi_reduction <add>, %80, %cst_25 [1, 2] : vector<1x4x256xf32> to vector<1xf32>
    %82 = vector.shape_cast %81 : vector<1xf32> to vector<1x1x1xf32>
    %83 = vector.extract %82[0, 0, 0] : f32 from vector<1x1x1xf32>
    %cst_26 = arith.constant 1.024000e+03 : f32
    %84 = arith.subf %cst_26, %83 : f32
    %cst_27 = arith.constant 1.024000e+03 : f32
    %cst_28 = arith.constant 1.024000e+03 : f32
    %85 = arith.subf %cst_27, %cst_28 : f32
    %cst_29 = arith.constant 5.000000e-01 : f32
    %86 = arith.mulf %cst_29, %85 : f32
    %87 = arith.subf %84, %86 : f32
    %88 = tpu.iota {dimensions = array<i32: 1>} : vector<8x128xi32>
    %c0_i32 = arith.constant 0 : i32
    %89 = vector.broadcast %c0_i32 : i32 to vector<8x128xi32>
    %90 = arith.cmpi eq, %88, %89 : vector<8x128xi32>
    %cst_30 = arith.constant 0.000000e+00 : f32
    %91 = vector.broadcast %61 : f32 to vector<8x128xf32>
    %92 = vector.broadcast %cst_30 : f32 to vector<8x128xf32>
    %93 = arith.select %90, %91, %92 : vector<8x128xi1>, vector<8x128xf32>
    %c1_i32_31 = arith.constant 1 : i32
    %94 = vector.broadcast %c1_i32_31 : i32 to vector<8x128xi32>
    %95 = arith.cmpi eq, %88, %94 : vector<8x128xi32>
    %cst_32 = arith.constant 0.000000e+00 : f32
    %96 = vector.broadcast %65 : f32 to vector<8x128xf32>
    %97 = vector.broadcast %cst_32 : f32 to vector<8x128xf32>
    %98 = arith.select %95, %96, %97 : vector<8x128xi1>, vector<8x128xf32>
    %99 = arith.addf %93, %98 : vector<8x128xf32>
    %c2_i32 = arith.constant 2 : i32
    %100 = vector.broadcast %c2_i32 : i32 to vector<8x128xi32>
    %101 = arith.cmpi eq, %88, %100 : vector<8x128xi32>
    %cst_33 = arith.constant 0.000000e+00 : f32
    %102 = vector.broadcast %69 : f32 to vector<8x128xf32>
    %103 = vector.broadcast %cst_33 : f32 to vector<8x128xf32>
    %104 = arith.select %101, %102, %103 : vector<8x128xi1>, vector<8x128xf32>
    %105 = arith.addf %99, %104 : vector<8x128xf32>
    %c3_i32 = arith.constant 3 : i32
    %106 = vector.broadcast %c3_i32 : i32 to vector<8x128xi32>
    %107 = arith.cmpi eq, %88, %106 : vector<8x128xi32>
    %cst_34 = arith.constant 0.000000e+00 : f32
    %108 = vector.broadcast %79 : f32 to vector<8x128xf32>
    %109 = vector.broadcast %cst_34 : f32 to vector<8x128xf32>
    %110 = arith.select %107, %108, %109 : vector<8x128xi1>, vector<8x128xf32>
    %111 = arith.addf %105, %110 : vector<8x128xf32>
    %c4_i32 = arith.constant 4 : i32
    %112 = vector.broadcast %c4_i32 : i32 to vector<8x128xi32>
    %113 = arith.cmpi eq, %88, %112 : vector<8x128xi32>
    %cst_35 = arith.constant 0.000000e+00 : f32
    %114 = vector.broadcast %87 : f32 to vector<8x128xf32>
    %115 = vector.broadcast %cst_35 : f32 to vector<8x128xf32>
    %116 = arith.select %113, %114, %115 : vector<8x128xi1>, vector<8x128xf32>
    %117 = arith.addf %111, %116 : vector<8x128xf32>
    %c5_i32 = arith.constant 5 : i32
    %118 = vector.broadcast %c5_i32 : i32 to vector<8x128xi32>
    %119 = arith.cmpi eq, %88, %118 : vector<8x128xi32>
    %cst_36 = arith.constant 0.000000e+00 : f32
    %120 = vector.broadcast %73 : f32 to vector<8x128xf32>
    %121 = vector.broadcast %cst_36 : f32 to vector<8x128xf32>
    %122 = arith.select %119, %120, %121 : vector<8x128xi1>, vector<8x128xf32>
    %123 = arith.addf %117, %122 : vector<8x128xf32>
    %c0_i32_37 = arith.constant 0 : i32
    %124 = arith.cmpi eq, %arg1, %c0_i32_37 : i32
    %125 = arith.extui %124 : i1 to i32
    %c0_i32_38 = arith.constant 0 : i32
    %126 = arith.cmpi ne, %125, %c0_i32_38 : i32
    scf.if %126 {
      %c0_41 = arith.constant 0 : index
      %c0_42 = arith.constant 0 : index
      %c0_43 = arith.constant 0 : index
      %130 = vector.load %arg5[%c0_41, %c0_42, %c0_43] : memref<1x8x128xf32, #tpu.memory_space<vmem>>, vector<1x8x128xf32>
      %131 = vector.shape_cast %130 : vector<1x8x128xf32> to vector<8x128xf32>
      %132 = vector.shape_cast %123 : vector<8x128xf32> to vector<1x8x128xf32>
      tpu.vector_store %arg5[%c0_41, %c0_42, %c0_43], %132 {strides = array<i32>} : memref<1x8x128xf32, #tpu.memory_space<vmem>>, vector<1x8x128xf32>,
    } else {
    }
    %c0_i32_39 = arith.constant 0 : i32
    %127 = arith.cmpi sgt, %arg1, %c0_i32_39 : i32
    %128 = arith.extui %127 : i1 to i32
    %c0_i32_40 = arith.constant 0 : i32
    %129 = arith.cmpi ne, %128, %c0_i32_40 : i32
    scf.if %129 {
      %c0_41 = arith.constant 0 : index
      %c0_42 = arith.constant 0 : index
      %c0_43 = arith.constant 0 : index
      %130 = vector.load %arg5[%c0_41, %c0_42, %c0_43] : memref<1x8x128xf32, #tpu.memory_space<vmem>>, vector<1x8x128xf32>
      %131 = vector.shape_cast %130 : vector<1x8x128xf32> to vector<8x128xf32>
      %132 = arith.addf %131, %123 : vector<8x128xf32>
      %c0_44 = arith.constant 0 : index
      %c0_45 = arith.constant 0 : index
      %c0_46 = arith.constant 0 : index
      %133 = vector.load %arg5[%c0_44, %c0_45, %c0_46] : memref<1x8x128xf32, #tpu.memory_space<vmem>>, vector<1x8x128xf32>
      %134 = vector.shape_cast %133 : vector<1x8x128xf32> to vector<8x128xf32>
      %135 = vector.shape_cast %132 : vector<8x128xf32> to vector<1x8x128xf32>
      tpu.vector_store %arg5[%c0_44, %c0_45, %c0_46], %135 {strides = array<i32>} : memref<1x8x128xf32, #tpu.memory_space<vmem>>, vector<1x8x128xf32>,
    } else {
    }
    return
  }
  func.func @transform_0(%arg0: i32, %arg1: i32) -> (i32, i32) {
    %c0_i32 = arith.constant 0 : i32
    %c0_i32_0 = arith.constant 0 : i32
    %c0_i32_1 = arith.constant 0 : i32
    return %c0_i32, %c0_i32_0 : i32, i32
  }
  func.func @transform_1(%arg0: i32, %arg1: i32) -> (i32, i32, i32) {
    %c0_i32 = arith.constant 0 : i32
    %c0_i32_0 = arith.constant 0 : i32
    return %arg0, %arg1, %c0_i32 : i32, i32, i32
  }
  func.func @transform_2(%arg0: i32, %arg1: i32) -> (i32, i32, i32) {
    %c0_i32 = arith.constant 0 : i32
    %c0_i32_0 = arith.constant 0 : i32
    return %arg0, %arg1, %c0_i32 : i32, i32, i32
  }
  func.func @transform_3(%arg0: i32, %arg1: i32) -> (i32, i32, i32) {
    %c0_i32 = arith.constant 0 : i32
    %c0_i32_0 = arith.constant 0 : i32
    %c0_i32_1 = arith.constant 0 : i32
    return %arg0, %c0_i32, %c0_i32_0 : i32, i32, i32
  }
}

module attributes {stable_mosaic.version = 11 : i64} {
  func.func @kernel(%arg0: i32, %arg1: i32, %arg2: memref<4x256xf32, #tpu.memory_space<vmem>>, %arg3: memref<1x4x256xf32, #tpu.memory_space<vmem>>, %arg4: memref<1x4x256xf32, #tpu.memory_space<vmem>>, %arg5: memref<1x8x128xf32, #tpu.memory_space<vmem>>) attributes {dimension_semantics = [#tpu.dimension_semantics<parallel>, #tpu.dimension_semantics<arbitrary>], iteration_bounds = array<i64: 2, 1>, scalar_prefetch = 0 : i64, scratch_operands = 0 : i64, tpu.core_type = #tpu.core_type<tc>, window_params = [{pipeline_mode = #tpu.pipeline_mode<synchronous>, transform_indices = @transform_0, window_bounds = array<i64: 4, 256>}, {transform_indices = @transform_1, window_bounds = array<i64: 1, 4, 256>}, {transform_indices = @transform_2, window_bounds = array<i64: 1, 4, 256>}, {transform_indices = @transform_3, window_bounds = array<i64: 1, 8, 128>}]} {
    %c0 = arith.constant 0 : index
    %c0_0 = arith.constant 0 : index
    %c0_1 = arith.constant 0 : index
    %0 = vector.load %arg3[%c0, %c0_0, %c0_1] : memref<1x4x256xf32, #tpu.memory_space<vmem>>, vector<1x4x256xf32>
    %1 = vector.shape_cast %0 : vector<1x4x256xf32> to vector<4x256xf32>
    %c0_2 = arith.constant 0 : index
    %c0_3 = arith.constant 0 : index
    %c0_4 = arith.constant 0 : index
    %2 = vector.load %arg4[%c0_2, %c0_3, %c0_4] : memref<1x4x256xf32, #tpu.memory_space<vmem>>, vector<1x4x256xf32>
    %3 = vector.shape_cast %2 : vector<1x4x256xf32> to vector<4x256xf32>
    %c0_5 = arith.constant 0 : index
    %c0_6 = arith.constant 0 : index
    %4 = vector.load %arg2[%c0_5, %c0_6] : memref<4x256xf32, #tpu.memory_space<vmem>>, vector<1x256xf32>
    %5 = vector.shape_cast %4 : vector<1x256xf32> to vector<1x256xf32>
    %6 = vector.broadcast %5 : vector<1x256xf32> to vector<4x256xf32>
    %cst = arith.constant 0.000000e+00 : f32
    %7 = vector.broadcast %cst : f32 to vector<4x256xf32>
    %8 = arith.cmpf ogt, %6, %7 : vector<4x256xf32>
    %c1 = arith.constant 1 : index
    %c0_7 = arith.constant 0 : index
    %9 = vector.load %arg2[%c1, %c0_7] : memref<4x256xf32, #tpu.memory_space<vmem>>, vector<1x256xf32>
    %10 = vector.shape_cast %9 : vector<1x256xf32> to vector<1x256xf32>
    %11 = vector.broadcast %10 : vector<1x256xf32> to vector<4x256xf32>
    %cst_8 = arith.constant 0.000000e+00 : f32
    %12 = vector.broadcast %cst_8 : f32 to vector<4x256xf32>
    %13 = arith.cmpf ogt, %11, %12 : vector<4x256xf32>
    %c2 = arith.constant 2 : index
    %c0_9 = arith.constant 0 : index
    %14 = vector.load %arg2[%c2, %c0_9] : memref<4x256xf32, #tpu.memory_space<vmem>>, vector<1x256xf32>
    %15 = vector.shape_cast %14 : vector<1x256xf32> to vector<1x256xf32>
    %16 = vector.broadcast %15 : vector<1x256xf32> to vector<4x256xf32>
    %cst_10 = arith.constant 0.000000e+00 : f32
    %17 = vector.broadcast %cst_10 : f32 to vector<4x256xf32>
    %18 = arith.cmpf ogt, %16, %17 : vector<4x256xf32>
    %c3 = arith.constant 3 : index
    %c0_11 = arith.constant 0 : index
    %19 = vector.load %arg2[%c3, %c0_11] : memref<4x256xf32, #tpu.memory_space<vmem>>, vector<1x256xf32>
    %20 = vector.shape_cast %19 : vector<1x256xf32> to vector<1x256xf32>
    %21 = vector.broadcast %20 : vector<1x256xf32> to vector<4x256xf32>
    %cst_12 = arith.constant 0.000000e+00 : f32
    %22 = vector.broadcast %cst_12 : f32 to vector<4x256xf32>
    %23 = arith.cmpf ogt, %21, %22 : vector<4x256xf32>
    %cst_13 = arith.constant 5.000000e-01 : f32
    %24 = vector.broadcast %cst_13 : f32 to vector<4x256xf32>
    %25 = arith.mulf %24, %1 : vector<4x256xf32>
    %26 = math.tanh %25 : vector<4x256xf32>
    %cst_14 = arith.constant 5.000000e-01 : f32
    %27 = vector.broadcast %cst_14 : f32 to vector<4x256xf32>
    %28 = arith.mulf %27, %26 : vector<4x256xf32>
    %cst_15 = arith.constant 5.000000e-01 : f32
    %29 = vector.broadcast %cst_15 : f32 to vector<4x256xf32>
    %30 = arith.subf %29, %28 : vector<4x256xf32>
    %31 = vector.extract_strided_slice %30 {offsets = [0, 255], sizes = [4, 1], strides = [1, 1]} : vector<4x256xf32> to vector<4x1xf32>
    %32 = vector.extract_strided_slice %30 {offsets = [0, 0], sizes = [4, 255], strides = [1, 1]} : vector<4x256xf32> to vector<4x255xf32>
    %33 = tpu.concatenate %31, %32 in 1 : vector<4x1xf32>, vector<4x255xf32> -> vector<4x256xf32>
    %34 = arith.select %8, %30, %33 : vector<4x256xi1>, vector<4x256xf32>
    %35 = vector.extract_strided_slice %30 {offsets = [0, 1], sizes = [4, 255], strides = [1, 1]} : vector<4x256xf32> to vector<4x255xf32>
    %36 = vector.extract_strided_slice %30 {offsets = [0, 0], sizes = [4, 1], strides = [1, 1]} : vector<4x256xf32> to vector<4x1xf32>
    %37 = tpu.concatenate %35, %36 in 1 : vector<4x255xf32>, vector<4x1xf32> -> vector<4x256xf32>
    %38 = arith.select %13, %30, %37 : vector<4x256xi1>, vector<4x256xf32>
    %39 = arith.maximumf %34, %38 : vector<4x256xf32>
    %40 = arith.maximumf %30, %39 : vector<4x256xf32>
    %41 = vector.extract_strided_slice %40 {offsets = [0, 240], sizes = [4, 16], strides = [1, 1]} : vector<4x256xf32> to vector<4x16xf32>
    %42 = vector.extract_strided_slice %40 {offsets = [0, 0], sizes = [4, 240], strides = [1, 1]} : vector<4x256xf32> to vector<4x240xf32>
    %43 = tpu.concatenate %41, %42 in 1 : vector<4x16xf32>, vector<4x240xf32> -> vector<4x256xf32>
    %44 = arith.select %18, %40, %43 : vector<4x256xi1>, vector<4x256xf32>
    %45 = vector.extract_strided_slice %40 {offsets = [0, 16], sizes = [4, 240], strides = [1, 1]} : vector<4x256xf32> to vector<4x240xf32>
    %46 = vector.extract_strided_slice %40 {offsets = [0, 0], sizes = [4, 16], strides = [1, 1]} : vector<4x256xf32> to vector<4x16xf32>
    %47 = tpu.concatenate %45, %46 in 1 : vector<4x240xf32>, vector<4x16xf32> -> vector<4x256xf32>
    %48 = arith.select %23, %40, %47 : vector<4x256xi1>, vector<4x256xf32>
    %49 = arith.maximumf %44, %48 : vector<4x256xf32>
    %50 = arith.maximumf %40, %49 : vector<4x256xf32>
    %51 = arith.subf %50, %30 : vector<4x256xf32>
    %52 = vector.extract_strided_slice %3 {offsets = [0, 255], sizes = [4, 1], strides = [1, 1]} : vector<4x256xf32> to vector<4x1xf32>
    %53 = vector.extract_strided_slice %3 {offsets = [0, 0], sizes = [4, 255], strides = [1, 1]} : vector<4x256xf32> to vector<4x255xf32>
    %54 = tpu.concatenate %52, %53 in 1 : vector<4x1xf32>, vector<4x255xf32> -> vector<4x256xf32>
    %55 = arith.select %8, %3, %54 : vector<4x256xi1>, vector<4x256xf32>
    %56 = vector.extract_strided_slice %3 {offsets = [0, 1], sizes = [4, 255], strides = [1, 1]} : vector<4x256xf32> to vector<4x255xf32>
    %57 = vector.extract_strided_slice %3 {offsets = [0, 0], sizes = [4, 1], strides = [1, 1]} : vector<4x256xf32> to vector<4x1xf32>
    %58 = tpu.concatenate %56, %57 in 1 : vector<4x255xf32>, vector<4x1xf32> -> vector<4x256xf32>
    %59 = arith.select %13, %3, %58 : vector<4x256xi1>, vector<4x256xf32>
    %60 = arith.minimumf %55, %59 : vector<4x256xf32>
    %61 = arith.minimumf %3, %60 : vector<4x256xf32>
    %62 = vector.extract_strided_slice %61 {offsets = [0, 240], sizes = [4, 16], strides = [1, 1]} : vector<4x256xf32> to vector<4x16xf32>
    %63 = vector.extract_strided_slice %61 {offsets = [0, 0], sizes = [4, 240], strides = [1, 1]} : vector<4x256xf32> to vector<4x240xf32>
    %64 = tpu.concatenate %62, %63 in 1 : vector<4x16xf32>, vector<4x240xf32> -> vector<4x256xf32>
    %65 = arith.select %18, %61, %64 : vector<4x256xi1>, vector<4x256xf32>
    %66 = vector.extract_strided_slice %61 {offsets = [0, 16], sizes = [4, 240], strides = [1, 1]} : vector<4x256xf32> to vector<4x240xf32>
    %67 = vector.extract_strided_slice %61 {offsets = [0, 0], sizes = [4, 16], strides = [1, 1]} : vector<4x256xf32> to vector<4x16xf32>
    %68 = tpu.concatenate %66, %67 in 1 : vector<4x240xf32>, vector<4x16xf32> -> vector<4x256xf32>
    %69 = arith.select %23, %61, %68 : vector<4x256xi1>, vector<4x256xf32>
    %70 = arith.minimumf %65, %69 : vector<4x256xf32>
    %71 = arith.minimumf %61, %70 : vector<4x256xf32>
    %72 = arith.subf %3, %71 : vector<4x256xf32>
    %73 = arith.mulf %72, %51 : vector<4x256xf32>
    %74 = vector.shape_cast %73 : vector<4x256xf32> to vector<1x4x256xf32>
    %cst_16 = arith.constant dense<0.000000e+00> : vector<1xf32>
    %75 = vector.multi_reduction <add>, %74, %cst_16 [1, 2] : vector<1x4x256xf32> to vector<1xf32>
    %76 = vector.shape_cast %75 : vector<1xf32> to vector<1x1x1xf32>
    %77 = vector.extract %76[0, 0, 0] : f32 from vector<1x1x1xf32>
    %78 = vector.shape_cast %51 : vector<4x256xf32> to vector<1x4x256xf32>
    %cst_17 = arith.constant dense<0.000000e+00> : vector<1xf32>
    %79 = vector.multi_reduction <add>, %78, %cst_17 [1, 2] : vector<1x4x256xf32> to vector<1xf32>
    %80 = vector.shape_cast %79 : vector<1xf32> to vector<1x1x1xf32>
    %81 = vector.extract %80[0, 0, 0] : f32 from vector<1x1x1xf32>
    %82 = vector.shape_cast %72 : vector<4x256xf32> to vector<1x4x256xf32>
    %cst_18 = arith.constant dense<0.000000e+00> : vector<1xf32>
    %83 = vector.multi_reduction <add>, %82, %cst_18 [1, 2] : vector<1x4x256xf32> to vector<1xf32>
    %84 = vector.shape_cast %83 : vector<1xf32> to vector<1x1x1xf32>
    %85 = vector.extract %84[0, 0, 0] : f32 from vector<1x1x1xf32>
    %86 = vector.shape_cast %3 : vector<4x256xf32> to vector<1x4x256xf32>
    %cst_19 = arith.constant dense<0.000000e+00> : vector<1xf32>
    %87 = vector.multi_reduction <add>, %86, %cst_19 [1, 2] : vector<1x4x256xf32> to vector<1xf32>
    %88 = vector.shape_cast %87 : vector<1xf32> to vector<1x1x1xf32>
    %89 = vector.extract %88[0, 0, 0] : f32 from vector<1x1x1xf32>
    %90 = arith.mulf %30, %3 : vector<4x256xf32>
    %91 = vector.shape_cast %90 : vector<4x256xf32> to vector<1x4x256xf32>
    %cst_20 = arith.constant dense<0.000000e+00> : vector<1xf32>
    %92 = vector.multi_reduction <add>, %91, %cst_20 [1, 2] : vector<1x4x256xf32> to vector<1xf32>
    %93 = vector.shape_cast %92 : vector<1xf32> to vector<1x1x1xf32>
    %94 = vector.extract %93[0, 0, 0] : f32 from vector<1x1x1xf32>
    %95 = arith.subf %89, %94 : f32
    %96 = vector.shape_cast %30 : vector<4x256xf32> to vector<1x4x256xf32>
    %cst_21 = arith.constant dense<0.000000e+00> : vector<1xf32>
    %97 = vector.multi_reduction <add>, %96, %cst_21 [1, 2] : vector<1x4x256xf32> to vector<1xf32>
    %98 = vector.shape_cast %97 : vector<1xf32> to vector<1x1x1xf32>
    %99 = vector.extract %98[0, 0, 0] : f32 from vector<1x1x1xf32>
    %cst_22 = arith.constant 1.024000e+03 : f32
    %100 = arith.subf %cst_22, %99 : f32
    %cst_23 = arith.constant 1.024000e+03 : f32
    %cst_24 = arith.constant 1.024000e+03 : f32
    %101 = arith.subf %cst_23, %cst_24 : f32
    %cst_25 = arith.constant 5.000000e-01 : f32
    %102 = arith.mulf %cst_25, %101 : f32
    %103 = arith.subf %100, %102 : f32
    %104 = tpu.iota {dimensions = array<i32: 1>} : vector<8x128xi32>
    %c0_i32 = arith.constant 0 : i32
    %105 = vector.broadcast %c0_i32 : i32 to vector<8x128xi32>
    %106 = arith.cmpi eq, %104, %105 : vector<8x128xi32>
    %cst_26 = arith.constant 0.000000e+00 : f32
    %107 = vector.broadcast %77 : f32 to vector<8x128xf32>
    %108 = vector.broadcast %cst_26 : f32 to vector<8x128xf32>
    %109 = arith.select %106, %107, %108 : vector<8x128xi1>, vector<8x128xf32>
    %c1_i32 = arith.constant 1 : i32
    %110 = vector.broadcast %c1_i32 : i32 to vector<8x128xi32>
    %111 = arith.cmpi eq, %104, %110 : vector<8x128xi32>
    %cst_27 = arith.constant 0.000000e+00 : f32
    %112 = vector.broadcast %81 : f32 to vector<8x128xf32>
    %113 = vector.broadcast %cst_27 : f32 to vector<8x128xf32>
    %114 = arith.select %111, %112, %113 : vector<8x128xi1>, vector<8x128xf32>
    %115 = arith.addf %109, %114 : vector<8x128xf32>
    %c2_i32 = arith.constant 2 : i32
    %116 = vector.broadcast %c2_i32 : i32 to vector<8x128xi32>
    %117 = arith.cmpi eq, %104, %116 : vector<8x128xi32>
    %cst_28 = arith.constant 0.000000e+00 : f32
    %118 = vector.broadcast %85 : f32 to vector<8x128xf32>
    %119 = vector.broadcast %cst_28 : f32 to vector<8x128xf32>
    %120 = arith.select %117, %118, %119 : vector<8x128xi1>, vector<8x128xf32>
    %121 = arith.addf %115, %120 : vector<8x128xf32>
    %c3_i32 = arith.constant 3 : i32
    %122 = vector.broadcast %c3_i32 : i32 to vector<8x128xi32>
    %123 = arith.cmpi eq, %104, %122 : vector<8x128xi32>
    %cst_29 = arith.constant 0.000000e+00 : f32
    %124 = vector.broadcast %95 : f32 to vector<8x128xf32>
    %125 = vector.broadcast %cst_29 : f32 to vector<8x128xf32>
    %126 = arith.select %123, %124, %125 : vector<8x128xi1>, vector<8x128xf32>
    %127 = arith.addf %121, %126 : vector<8x128xf32>
    %c4_i32 = arith.constant 4 : i32
    %128 = vector.broadcast %c4_i32 : i32 to vector<8x128xi32>
    %129 = arith.cmpi eq, %104, %128 : vector<8x128xi32>
    %cst_30 = arith.constant 0.000000e+00 : f32
    %130 = vector.broadcast %103 : f32 to vector<8x128xf32>
    %131 = vector.broadcast %cst_30 : f32 to vector<8x128xf32>
    %132 = arith.select %129, %130, %131 : vector<8x128xi1>, vector<8x128xf32>
    %133 = arith.addf %127, %132 : vector<8x128xf32>
    %c5_i32 = arith.constant 5 : i32
    %134 = vector.broadcast %c5_i32 : i32 to vector<8x128xi32>
    %135 = arith.cmpi eq, %104, %134 : vector<8x128xi32>
    %cst_31 = arith.constant 0.000000e+00 : f32
    %136 = vector.broadcast %89 : f32 to vector<8x128xf32>
    %137 = vector.broadcast %cst_31 : f32 to vector<8x128xf32>
    %138 = arith.select %135, %136, %137 : vector<8x128xi1>, vector<8x128xf32>
    %139 = arith.addf %133, %138 : vector<8x128xf32>
    %c0_i32_32 = arith.constant 0 : i32
    %140 = arith.cmpi eq, %arg1, %c0_i32_32 : i32
    %141 = arith.extui %140 : i1 to i32
    %c0_i32_33 = arith.constant 0 : i32
    %142 = arith.cmpi ne, %141, %c0_i32_33 : i32
    scf.if %142 {
      %c0_36 = arith.constant 0 : index
      %c0_37 = arith.constant 0 : index
      %c0_38 = arith.constant 0 : index
      %146 = vector.load %arg5[%c0_36, %c0_37, %c0_38] : memref<1x8x128xf32, #tpu.memory_space<vmem>>, vector<1x8x128xf32>
      %147 = vector.shape_cast %146 : vector<1x8x128xf32> to vector<8x128xf32>
      %148 = vector.shape_cast %139 : vector<8x128xf32> to vector<1x8x128xf32>
      tpu.vector_store %arg5[%c0_36, %c0_37, %c0_38], %148 {strides = array<i32>} : memref<1x8x128xf32, #tpu.memory_space<vmem>>, vector<1x8x128xf32>,
    } else {
    }
    %c0_i32_34 = arith.constant 0 : i32
    %143 = arith.cmpi sgt, %arg1, %c0_i32_34 : i32
    %144 = arith.extui %143 : i1 to i32
    %c0_i32_35 = arith.constant 0 : i32
    %145 = arith.cmpi ne, %144, %c0_i32_35 : i32
    scf.if %145 {
      %c0_36 = arith.constant 0 : index
      %c0_37 = arith.constant 0 : index
      %c0_38 = arith.constant 0 : index
      %146 = vector.load %arg5[%c0_36, %c0_37, %c0_38] : memref<1x8x128xf32, #tpu.memory_space<vmem>>, vector<1x8x128xf32>
      %147 = vector.shape_cast %146 : vector<1x8x128xf32> to vector<8x128xf32>
      %148 = arith.addf %147, %139 : vector<8x128xf32>
      %c0_39 = arith.constant 0 : index
      %c0_40 = arith.constant 0 : index
      %c0_41 = arith.constant 0 : index
      %149 = vector.load %arg5[%c0_39, %c0_40, %c0_41] : memref<1x8x128xf32, #tpu.memory_space<vmem>>, vector<1x8x128xf32>
      %150 = vector.shape_cast %149 : vector<1x8x128xf32> to vector<8x128xf32>
      %151 = vector.shape_cast %148 : vector<8x128xf32> to vector<1x8x128xf32>
      tpu.vector_store %arg5[%c0_39, %c0_40, %c0_41], %151 {strides = array<i32>} : memref<1x8x128xf32, #tpu.memory_space<vmem>>, vector<1x8x128xf32>,
    } else {
    }
    return
  }
  func.func @transform_0(%arg0: i32, %arg1: i32) -> (i32, i32) {
    %c0_i32 = arith.constant 0 : i32
    %c0_i32_0 = arith.constant 0 : i32
    %c0_i32_1 = arith.constant 0 : i32
    return %c0_i32, %c0_i32_0 : i32, i32
  }
  func.func @transform_1(%arg0: i32, %arg1: i32) -> (i32, i32, i32) {
    %c0_i32 = arith.constant 0 : i32
    %c0_i32_0 = arith.constant 0 : i32
    return %arg0, %arg1, %c0_i32 : i32, i32, i32
  }
  func.func @transform_2(%arg0: i32, %arg1: i32) -> (i32, i32, i32) {
    %c0_i32 = arith.constant 0 : i32
    %c0_i32_0 = arith.constant 0 : i32
    return %arg0, %arg1, %c0_i32 : i32, i32, i32
  }
  func.func @transform_3(%arg0: i32, %arg1: i32) -> (i32, i32, i32) {
    %c0_i32 = arith.constant 0 : i32
    %c0_i32_0 = arith.constant 0 : i32
    %c0_i32_1 = arith.constant 0 : i32
    return %arg0, %c0_i32, %c0_i32_0 : i32, i32, i32
  }
}

</mosaic_0001>

<llo_original>
// kernel: _boundary_dice_impl.1
$region0: #{_boundary_dice_impl.1}
  #allocation0 [shape = 'u32[]', space=smem, size = 0x4, offset = 0x4, fixed_abs, tag = 'smem constant byte address 0x4 - core index']
  #allocation1 [shape = 'u32[72,128]{1,0:T(1,128)}', space=vmem, size = 0x9000, scoped, tag = 'internal scratch']
  %s0 = inlined_call_operand.vmem [shape: f32[4,256], index: 0, kind: input, shape index: {}]
  %s1 = inlined_call_operand.vmem [shape: f32[2,4,256], index: 1, kind: input, shape index: {}]
  %s2 = inlined_call_operand.vmem [shape: f32[2,4,256], index: 2, kind: input, shape index: {}]
  %s3 = inlined_call_operand.vmem [shape: f32[2,8,128], index: 3, kind: output, shape index: {}]
  %s4 = sld [smem:[#allocation0]]
  $region53: #{_boundary_dice_impl.1} parent=0
    _
  %s6 = ssub.s32 1, %s4
  %s7 = scalar_select 0, %s6, %s4
  loop: start=0, step=1, limit=4
  $region2: #{_boundary_dice_impl.1} parent=0 // loop_pre_header
    _
  $region3: #{_boundary_dice_impl.1} parent=0 // loop_header
    %s9 = sphi 0, %s13
    %p10 = scmp.ge.s32.totalorder %s9, 4
    %s16 = sphi 0, %s28
    %s17 = sphi 0, %s24
    %s18 = sphi 0, %s16
    %s19 = sphi 0, %s17
    %s20 = sphi 0, %s18
    %s21 = sphi 0, %s19
    %s29 = sphi 0, %s29
    %s31 = sphi 0, %s29
    %s32 = sphi 0, %s31
    %s46 = sphi 0, %s32
    %s54 = sphi 0, %s56
    %s57 = sphi 0, %s54
    %s58 = sphi 0, %s57
    %s74 = sphi 0, %s58
    %s82 = sphi 0, %s84
    %s85 = sphi 0, %s82
    %s86 = sphi 0, %s85
    %s102 = sphi 0, %s86
    %s108 = sphi 0, %s110
    %s111 = sphi 0, %s108
    %s112 = sphi 0, %s111
    %s128 = sphi 0, %s112
  $region4: #{_boundary_dice_impl.1} parent=0 // loop_header_branch
    %12 = sbr.rel (%p10) target = $region8
  $region5: #{_boundary_dice_impl.1} parent=0 // loop_body
    %s14 = ssub.s32 %s9, 1
    %s15 = ssub.s32 %s9, 2
    %s22 = sadd.s32 1, %s17
    %p23 = scmp.ge.s32.totalorder %s22, 1
    %s24 = scalar_select %p23, 0, %s22
    %s25 = sadd.s32 1, %s16
    %s26 = scalar_select %p23, %s25, %s16
    %p27 = scmp.ge.s32.totalorder %s26, 2
    %s28 = scalar_select %p27, 0, %s26
    %s30 = sadd.s32 %s29, 1
    %p33 = scmp.eq.s32.totalorder %s9, 1
    %p34 = scmp.ne.s32.totalorder %s29, %s31
    %p35 = scmp.eq.s32.totalorder %s9, 0
    %p36 = por %p34, %p35
    %p37 = scmp.ne.s32.totalorder %s29, %s31
    %p38 = scmp.eq.s32.totalorder %s14, 1
    %p39 = por %p37, %p38
    %p40 = scmp.ne.s32.totalorder %s31, %s32
    %p41 = scmp.eq.s32.totalorder %s14, 0
    %p42 = por %p40, %p41
    %p43 = scmp.ne.s32.totalorder %s31, %s32
    %p44 = scmp.eq.s32.totalorder %s15, 1
    %p45 = por %p43, %p44
    %p47 = scmp.ne.s32.totalorder %s32, %s46
    %p48 = scmp.eq.s32.totalorder %s15, 0
    %p49 = por %p47, %p48
    %s50 = ssub.s32 %s16, %s28
    %s51 = ssub.s32 %s17, %s24
    %s52 = sor.u32 %s50, %s51
    %p53 = scmp.eq.s32.totalorder %s52, 0
    %s55 = sadd.s32 %s54, 1
    %s56 = scalar_select %p53, %s54, %s55
    %p59 = pneg %p53
    %p60 = scmp.eq.s32.totalorder %s9, 1
    %p61 = por %p59, %p60
    %p62 = scmp.ne.s32.totalorder %s54, %s57
    %p63 = scmp.eq.s32.totalorder %s9, 0
    %p64 = por %p62, %p63
    %p65 = scmp.ne.s32.totalorder %s54, %s57
    %p66 = scmp.eq.s32.totalorder %s14, 1
    %p67 = por %p65, %p66
    %p68 = scmp.ne.s32.totalorder %s57, %s58
    %p69 = scmp.eq.s32.totalorder %s14, 0
    %p70 = por %p68, %p69
    %p71 = scmp.ne.s32.totalorder %s57, %s58
    %p72 = scmp.eq.s32.totalorder %s15, 1
    %p73 = por %p71, %p72
    %p75 = scmp.ne.s32.totalorder %s58, %s74
    %p76 = scmp.eq.s32.totalorder %s15, 0
    %p77 = por %p75, %p76
    %s78 = ssub.s32 %s16, %s28
    %s79 = ssub.s32 %s17, %s24
    %s80 = sor.u32 %s78, %s79
    %p81 = scmp.eq.s32.totalorder %s80, 0
    %s83 = sadd.s32 %s82, 1
    %s84 = scalar_select %p81, %s82, %s83
    %p87 = pneg %p81
    %p88 = scmp.eq.s32.totalorder %s9, 1
    %p89 = por %p87, %p88
    %p90 = scmp.ne.s32.totalorder %s82, %s85
    %p91 = scmp.eq.s32.totalorder %s9, 0
    %p92 = por %p90, %p91
    %p93 = scmp.ne.s32.totalorder %s82, %s85
    %p94 = scmp.eq.s32.totalorder %s14, 1
    %p95 = por %p93, %p94
    %p96 = scmp.ne.s32.totalorder %s85, %s86
    %p97 = scmp.eq.s32.totalorder %s14, 0
    %p98 = por %p96, %p97
    %p99 = scmp.ne.s32.totalorder %s85, %s86
    %p100 = scmp.eq.s32.totalorder %s15, 1
    %p101 = por %p99, %p100
    %p103 = scmp.ne.s32.totalorder %s86, %s102
    %p104 = scmp.eq.s32.totalorder %s15, 0
    %p105 = por %p103, %p104
    %s106 = ssub.s32 %s16, %s28
    %p107 = scmp.eq.s32.totalorder %s106, 0
    %s109 = sadd.s32 %s108, 1
    %s110 = scalar_select %p107, %s108, %s109
    %p113 = pneg %p107
    %p114 = scmp.eq.s32.totalorder %s9, 1
    %p115 = por %p113, %p114
    %p116 = scmp.ne.s32.totalorder %s108, %s111
    %p117 = scmp.eq.s32.totalorder %s9, 0
    %p118 = por %p116, %p117
    %p119 = scmp.ne.s32.totalorder %s108, %s111
    %p120 = scmp.eq.s32.totalorder %s14, 1
    %p121 = por %p119, %p120
    %p122 = scmp.ne.s32.totalorder %s111, %s112
    %p123 = scmp.eq.s32.totalorder %s14, 0
    %p124 = por %p122, %p123
    %p125 = scmp.ne.s32.totalorder %s111, %s112
    %p126 = scmp.eq.s32.totalorder %s15, 1
    %p127 = por %p125, %p126
    %p129 = scmp.ne.s32.totalorder %s112, %s128
    %p130 = scmp.eq.s32.totalorder %s15, 0
    %p131 = por %p129, %p130
    %p132 = scmp.le.s32.totalorder 1, %s9
    %p133 = scmp.lt.s32.totalorder %s9, 3
    %p134 = pnand %p132, %p133
    %p135 = pneg %p134
    // Predicated region
    $region9: #{_boundary_dice_impl.1} parent=5 // pred_check
      _
    $region10: #{_boundary_dice_impl.1} parent=5 // pred_check_branch
      %137 = sbr.rel (%p134) target = $region12
    $region11: #{_boundary_dice_impl.1} parent=5 // pred_region
      %s138 = ssub.s32 %s9, 1
      // Predicated region
      $region13: #{_boundary_dice_impl.1} parent=11 // pred_check
        %p139 = pneg %p42
      $region14: #{_boundary_dice_impl.1} parent=11 // pred_check_branch
        %141 = sbr.rel (%p139) target = $region16
      $region15: #{_boundary_dice_impl.1} parent=11 // pred_region
        _
      $region16: #{_boundary_dice_impl.1} parent=11 // pred_fallthru
        _
    $region12: #{_boundary_dice_impl.1} parent=5 // pred_fallthru
      _
    %p142 = scmp.lt.s32.totalorder %s9, 2
    // Predicated region
    $region17: #{_boundary_dice_impl.1} parent=5 // pred_check
      %p143 = pneg %p142
    $region18: #{_boundary_dice_impl.1} parent=5 // pred_check_branch
      %145 = sbr.rel (%p143) target = $region20
    $region19: #{_boundary_dice_impl.1} parent=5 // pred_region
      // Predicated region
      $region21: #{_boundary_dice_impl.1} parent=19 // pred_check
        %p146 = pneg %p64
      $region22: #{_boundary_dice_impl.1} parent=19 // pred_check_branch
        %148 = sbr.rel (%p146) target = $region24
      $region23: #{_boundary_dice_impl.1} parent=19 // pred_region
        %p149 = scmp.lt.s32.totalorder %s16, 1
        %s150 = scalar_select %p149, %s16, 1
        %p151 = scmp.lt.s32.totalorder %s17, 0
        %s152 = scalar_select %p151, %s17, 0
        %s153 = smul.addr %s152, 2
        %s154 = smul.addr %s150, 2
        %s155 = sadd.s32 %s153, %s154
        %s156 = smul.addr %s155, 4
        %s157 = scalar_lea.vmem %s1, %s156
      $region24: #{_boundary_dice_impl.1} parent=19 // pred_fallthru
        _
      // Predicated region
      $region25: #{_boundary_dice_impl.1} parent=19 // pred_check
        %p158 = pneg %p92
      $region26: #{_boundary_dice_impl.1} parent=19 // pred_check_branch
        %160 = sbr.rel (%p158) target = $region28
      $region27: #{_boundary_dice_impl.1} parent=19 // pred_region
        %p161 = scmp.lt.s32.totalorder %s16, 1
        %s162 = scalar_select %p161, %s16, 1
        %p163 = scmp.lt.s32.totalorder %s17, 0
        %s164 = scalar_select %p163, %s17, 0
        %s165 = smul.addr %s164, 2
        %s166 = smul.addr %s162, 2
        %s167 = sadd.s32 %s165, %s166
        %s168 = smul.addr %s167, 4
        %s169 = scalar_lea.vmem %s2, %s168
      $region28: #{_boundary_dice_impl.1} parent=19 // pred_fallthru
        _
    $region20: #{_boundary_dice_impl.1} parent=5 // pred_fallthru
      _
    %p170 = scmp.le.s32.totalorder 1, %s9
    %p171 = scmp.lt.s32.totalorder %s9, 3
    %p172 = pnand %p170, %p171
    %p173 = pneg %p172
    // Predicated region
    $region29: #{_boundary_dice_impl.1} parent=5 // pred_check
      _
    $region30: #{_boundary_dice_impl.1} parent=5 // pred_check_branch
      %175 = sbr.rel (%p172) target = $region32
    $region31: #{_boundary_dice_impl.1} parent=5 // pred_region
      %s176 = ssub.s32 %s9, 1
      %p177 = pneg %p42
      %p178 = pneg %p39
      %p179 = scmp.lt.s32.totalorder %s18, 1
      %s180 = scalar_select %p179, %s18, 1
      %p181 = scmp.lt.s32.totalorder %s19, 0
      %s182 = scalar_select %p181, %s19, 0
      %s183 = smul.addr %s182, 2
      %s184 = smul.addr %s180, 2
      %s185 = sadd.s32 %s183, %s184
      %s186 = smul.addr %s185, 4
      %s187 = scalar_lea.vmem %s1, %s186
      %p188 = pneg %p70
      %p189 = pneg %p67
      %p190 = scmp.lt.s32.totalorder %s18, 1
      %s191 = scalar_select %p190, %s18, 1
      %p192 = scmp.lt.s32.totalorder %s19, 0
      %s193 = scalar_select %p192, %s19, 0
      %s194 = smul.addr %s193, 2
      %s195 = smul.addr %s191, 2
      %s196 = sadd.s32 %s194, %s195
      %s197 = smul.addr %s196, 4
      %s198 = scalar_lea.vmem %s2, %s197
      %p199 = pneg %p98
      %p200 = pneg %p95
      %p201 = pneg %p124
      %p202 = pneg %p121
      %p203 = scmp.lt.s32.totalorder %s18, 1
      %s204 = scalar_select %p203, %s18, 1
      %s205 = smul.addr %s204, 8
      %s206 = scalar_lea.vmem %s3, %s205
      %p207 = scmp.lt.s32.totalorder %s18, 1
      %s208 = scalar_select %p207, %s18, 1
      %p209 = scmp.lt.s32.totalorder %s19, 0
      %s210 = scalar_select %p209, %s19, 0
      %s211 = smul.addr %s210, 2
      %s212 = smul.addr %s208, 2
      %s213 = sadd.s32 %s211, %s212
      %s214 = smul.addr %s213, 4
      %s215 = scalar_lea.vmem %s1, %s214
      %p216 = scmp.lt.s32.totalorder %s18, 1
      %s217 = scalar_select %p216, %s18, 1
      %p218 = scmp.lt.s32.totalorder %s19, 0
      %s219 = scalar_select %p218, %s19, 0
      %s220 = smul.addr %s219, 2
      %s221 = smul.addr %s217, 2
      %s222 = sadd.s32 %s220, %s221
      %s223 = smul.addr %s222, 4
      %s224 = scalar_lea.vmem %s2, %s223
      %p225 = scmp.lt.s32.totalorder %s18, 1
      %s226 = scalar_select %p225, %s18, 1
      %s227 = smul.addr %s226, 8
      %s228 = scalar_lea.vmem %s3, %s227
      %v229 = vld [vmem:[%s215] sm:$0xff]
      %v230 = vld [vmem:[%s224] sm:$0xff]
      %v231 = vld [vmem:[%s0] ss:$4 sm:$0x3]
      %v233 = vperm.slane %v231, 0
      %v234 = vperm.slane %v231, 1
      %vm237 = vcmp.gt.f32.partialorder %v233, 0.0
      %vm238 = vcmp.gt.f32.partialorder %v234, 0.0
      %s239 = scalar_lea.vmem %s0, 1
      %v240 = vld [vmem:[%s239] ss:$4 sm:$0x3]
      %v242 = vperm.slane %v240, 0
      %v243 = vperm.slane %v240, 1
      %vm246 = vcmp.gt.f32.partialorder %v242, 0.0
      %vm247 = vcmp.gt.f32.partialorder %v243, 0.0
      %s248 = scalar_lea.vmem %s0, 2
      %v249 = vld [vmem:[%s248] ss:$4 sm:$0x3]
      %v251 = vperm.slane %v249, 0
      %v252 = vperm.slane %v249, 1
      %vm255 = vcmp.gt.f32.partialorder %v251, 0.0
      %vm256 = vcmp.gt.f32.partialorder %v252, 0.0
      %s257 = scalar_lea.vmem %s0, 3
      %v258 = vld [vmem:[%s257] ss:$4 sm:$0x3]
      %v260 = vperm.slane %v258, 0
      %v261 = vperm.slane %v258, 1
      %vm264 = vcmp.gt.f32.partialorder %v260, 0.0
      %vm265 = vcmp.gt.f32.partialorder %v261, 0.0
      %v266 = vmul.f32 %v229, 0.5
      %v267 = vtanh.pop %v266
      %v268 = vmul.f32 %v267, 0.5
      %v269 = vsub.f32 0.5, %v268
      %271 = vst [vmem:[#allocation1] ss:$2 sm:$0xff] %v269
      %v272 = vld.sshfl [vmem:[#allocation1] sm:$0xff pattern:$0x75316420]
      %v273 = vld.sshfl [vmem:[#allocation1 + $0x8] sm:$0xff pattern:$0x75316420]
      %276 = vrot.lane.b32.xlu0 %v272, 1
      %v277 = vpop.permute.xlu0 %276
      %278 = vrot.lane.b32.xlu0 %v273, 1
      %v279 = vpop.permute.xlu0 %278
      %v280 = vlaneseq
      %v281 = vand.u32 %v280, 127
      %vm282 = vcmp.lt.s32.totalorder %v281, 1
      %v283 = vsel %vm282, %v277, %v279
      %v284 = vsel %vm282, %v279, %v277
      %285 = vst [vmem:[#allocation1] ss:$2 sm:$0xff] %v269
      %v286 = vld.sshfl [vmem:[#allocation1] sm:$0xff pattern:$0x75316420]
      %v287 = vld.sshfl [vmem:[#allocation1 + $0x8] sm:$0xff pattern:$0x75316420]
      %v290 = vsel %vm237, %v286, %v284
      %v291 = vsel %vm238, %v287, %v283
      %292 = vst [vmem:[#allocation1] ss:$2 sm:$0xff] %v269
      %v293 = vld.sshfl [vmem:[#allocation1] sm:$0xff pattern:$0x75316420]
      %v294 = vld.sshfl [vmem:[#allocation1 + $0x8] sm:$0xff pattern:$0x75316420]
      %297 = vrot.lane.b32.xlu0 %v293, 127
      %v298 = vpop.permute.xlu0 %297
      %299 = vrot.lane.b32.xlu0 %v294, 127
      %v300 = vpop.permute.xlu0 %299
      %vm301 = vcmp.lt.s32.totalorder %v281, 127
      %v302 = vsel %vm301, %v298, %v300
      %v303 = vsel %vm301, %v300, %v298
      %304 = vst [vmem:[#allocation1] ss:$2 sm:$0xff] %v269
      %v305 = vld.sshfl [vmem:[#allocation1] sm:$0xff pattern:$0x75316420]
      %v306 = vld.sshfl [vmem:[#allocation1 + $0x8] sm:$0xff pattern:$0x75316420]
      %v309 = vsel %vm246, %v305, %v302
      %v310 = vsel %vm247, %v306, %v303
      %v311 = vmax.f32 %v290, %v309
      %v312 = vmax.f32 %v291, %v310
      %v315 = vrot.slane %v312, 4
      %vm316 = vcmask 1043456
      %v317 = vsel %vm316, %v311, %v315
      %v319 = vmax.f32 %v269, %v317
      %321 = vst [vmem:[#allocation1] ss:$2 sm:$0xff] %v319
      %v322 = vld.sshfl [vmem:[#allocation1] sm:$0xff pattern:$0x75316420]
      %v323 = vld.sshfl [vmem:[#allocation1 + $0x8] sm:$0xff pattern:$0x75316420]
      %326 = vrot.lane.b32.xlu0 %v322, 16
      %v327 = vpop.permute.xlu0 %326
      %328 = vrot.lane.b32.xlu0 %v323, 16
      %v329 = vpop.permute.xlu0 %328
      %vm330 = vcmp.lt.s32.totalorder %v281, 16
      %v331 = vsel %vm330, %v327, %v329
      %v332 = vsel %vm330, %v329, %v327
      %333 = vst [vmem:[#allocation1] ss:$2 sm:$0xff] %v319
      %v334 = vld.sshfl [vmem:[#allocation1] sm:$0xff pattern:$0x75316420]
      %v335 = vld.sshfl [vmem:[#allocation1 + $0x8] sm:$0xff pattern:$0x75316420]
      %v338 = vsel %vm255, %v334, %v332
      %v339 = vsel %vm256, %v335, %v331
      %340 = vst [vmem:[#allocation1] ss:$2 sm:$0xff] %v319
      %v341 = vld.sshfl [vmem:[#allocation1] sm:$0xff pattern:$0x75316420]
      %v342 = vld.sshfl [vmem:[#allocation1 + $0x8] sm:$0xff pattern:$0x75316420]
      %345 = vrot.lane.b32.xlu0 %v341, 112
      %v346 = vpop.permute.xlu0 %345
      %347 = vrot.lane.b32.xlu0 %v342, 112
      %v348 = vpop.permute.xlu0 %347
      %vm349 = vcmp.lt.s32.totalorder %v281, 112
      %v350 = vsel %vm349, %v346, %v348
      %v351 = vsel %vm349, %v348, %v346
      %352 = vst [vmem:[#allocation1] ss:$2 sm:$0xff] %v319
      %v353 = vld.sshfl [vmem:[#allocation1] sm:$0xff pattern:$0x75316420]
      %v354 = vld.sshfl [vmem:[#allocation1 + $0x8] sm:$0xff pattern:$0x75316420]
      %v357 = vsel %vm264, %v353, %v350
      %v358 = vsel %vm265, %v354, %v351
      %v359 = vmax.f32 %v338, %v357
      %v360 = vmax.f32 %v339, %v358
      %v363 = vrot.slane %v360, 4
      %v364 = vsel %vm316, %v359, %v363
      %v366 = vmax.f32 %v319, %v364
      %v367 = vsub.f32 %v366, %v269
      %369 = vst [vmem:[#allocation1] ss:$2 sm:$0xff] %v230
      %v370 = vld.sshfl [vmem:[#allocation1] sm:$0xff pattern:$0x75316420]
      %v371 = vld.sshfl [vmem:[#allocation1 + $0x8] sm:$0xff pattern:$0x75316420]
      %374 = vrot.lane.b32.xlu0 %v370, 1
      %v375 = vpop.permute.xlu0 %374
      %376 = vrot.lane.b32.xlu0 %v371, 1
      %v377 = vpop.permute.xlu0 %376
      %v378 = vsel %vm282, %v375, %v377
      %v379 = vsel %vm282, %v377, %v375
      %380 = vst [vmem:[#allocation1] ss:$2 sm:$0xff] %v230
      %v381 = vld.sshfl [vmem:[#allocation1] sm:$0xff pattern:$0x75316420]
      %v382 = vld.sshfl [vmem:[#allocation1 + $0x8] sm:$0xff pattern:$0x75316420]
      %v385 = vsel %vm237, %v381, %v379
      %v386 = vsel %vm238, %v382, %v378
      %387 = vst [vmem:[#allocation1] ss:$2 sm:$0xff] %v230
      %v388 = vld.sshfl [vmem:[#allocation1] sm:$0xff pattern:$0x75316420]
      %v389 = vld.sshfl [vmem:[#allocation1 + $0x8] sm:$0xff pattern:$0x75316420]
      %392 = vrot.lane.b32.xlu0 %v388, 127
      %v393 = vpop.permute.xlu0 %392
      %394 = vrot.lane.b32.xlu0 %v389, 127
      %v395 = vpop.permute.xlu0 %394
      %v396 = vsel %vm301, %v393, %v395
      %v397 = vsel %vm301, %v395, %v393
      %398 = vst [vmem:[#allocation1] ss:$2 sm:$0xff] %v230
      %v399 = vld.sshfl [vmem:[#allocation1] sm:$0xff pattern:$0x75316420]
      %v400 = vld.sshfl [vmem:[#allocation1 + $0x8] sm:$0xff pattern:$0x75316420]
      %v403 = vsel %vm246, %v399, %v396
      %v404 = vsel %vm247, %v400, %v397
      %v405 = vmin.f32 %v385, %v403
      %v406 = vmin.f32 %v386, %v404
      %v409 = vrot.slane %v406, 4
      %v410 = vsel %vm316, %v405, %v409
      %v412 = vmin.f32 %v230, %v410
      %414 = vst [vmem:[#allocation1] ss:$2 sm:$0xff] %v412
      %v415 = vld.sshfl [vmem:[#allocation1] sm:$0xff pattern:$0x75316420]
      %v416 = vld.sshfl [vmem:[#allocation1 + $0x8] sm:$0xff pattern:$0x75316420]
      %419 = vrot.lane.b32.xlu0 %v415, 16
      %v420 = vpop.permute.xlu0 %419
      %421 = vrot.lane.b32.xlu0 %v416, 16
      %v422 = vpop.permute.xlu0 %421
      %v423 = vsel %vm330, %v420, %v422
      %v424 = vsel %vm330, %v422, %v420
      %425 = vst [vmem:[#allocation1] ss:$2 sm:$0xff] %v412
      %v426 = vld.sshfl [vmem:[#allocation1] sm:$0xff pattern:$0x75316420]
      %v427 = vld.sshfl [vmem:[#allocation1 + $0x8] sm:$0xff pattern:$0x75316420]
      %v430 = vsel %vm255, %v426, %v424
      %v431 = vsel %vm256, %v427, %v423
      %432 = vst [vmem:[#allocation1] ss:$2 sm:$0xff] %v412
      %v433 = vld.sshfl [vmem:[#allocation1] sm:$0xff pattern:$0x75316420]
      %v434 = vld.sshfl [vmem:[#allocation1 + $0x8] sm:$0xff pattern:$0x75316420]
      %437 = vrot.lane.b32.xlu0 %v433, 112
      %v438 = vpop.permute.xlu0 %437
      %439 = vrot.lane.b32.xlu0 %v434, 112
      %v440 = vpop.permute.xlu0 %439
      %v441 = vsel %vm349, %v438, %v440
      %v442 = vsel %vm349, %v440, %v438
      %443 = vst [vmem:[#allocation1] ss:$2 sm:$0xff] %v412
      %v444 = vld.sshfl [vmem:[#allocation1] sm:$0xff pattern:$0x75316420]
      %v445 = vld.sshfl [vmem:[#allocation1 + $0x8] sm:$0xff pattern:$0x75316420]
      %v448 = vsel %vm264, %v444, %v441
      %v449 = vsel %vm265, %v445, %v442
      %v450 = vmin.f32 %v430, %v448
      %v451 = vmin.f32 %v431, %v449
      %v454 = vrot.slane %v451, 4
      %v455 = vsel %vm316, %v450, %v454
      %v457 = vmin.f32 %v412, %v455
      %v458 = vsub.f32 %v230, %v457
      %v459 = vmul.f32 %v458, %v367
      %461 = vst [vmem:[#allocation1] ss:$2 sm:$0xff] %v459
      %v462 = vld.sshfl [vmem:[#allocation1] sm:$0xff pattern:$0x75316420]
      %v463 = vld.sshfl [vmem:[#allocation1 + $0x8] sm:$0xff pattern:$0x75316420]
      %v466 = vsel %vm316, %v462, 0.0
      %v467 = vsel %vm316, %v463, 0.0
      %v468 = vadd.f32 %v466, %v467
      %469 = vadd.xlane.f32.xlu0 %v468
      %v470 = vpop.xlane.xlu0 %469
      %v471 = vrot.slane %v470, 4
      %v472 = vadd.f32 %v470, %v471
      %v473 = vrot.slane %v472, 2
      %v474 = vadd.f32 %v472, %v473
      %v475 = vrot.slane %v474, 1
      %v476 = vadd.f32 %v474, %v475
      %s477 = vtos %v476
      %479 = vst [vmem:[#allocation1] ss:$2 sm:$0xff] %v367
      %v480 = vld.sshfl [vmem:[#allocation1] sm:$0xff pattern:$0x75316420]
      %v481 = vld.sshfl [vmem:[#allocation1 + $0x8] sm:$0xff pattern:$0x75316420]
      %v484 = vsel %vm316, %v480, 0.0
      %v485 = vsel %vm316, %v481, 0.0
      %v486 = vadd.f32 %v484, %v485
      %487 = vadd.xlane.f32.xlu0 %v486
      %v488 = vpop.xlane.xlu0 %487
      %v489 = vrot.slane %v488, 4
      %v490 = vadd.f32 %v488, %v489
      %v491 = vrot.slane %v490, 2
      %v492 = vadd.f32 %v490, %v491
      %v493 = vrot.slane %v492, 1
      %v494 = vadd.f32 %v492, %v493
      %s495 = vtos %v494
      %497 = vst [vmem:[#allocation1] ss:$2 sm:$0xff] %v458
      %v498 = vld.sshfl [vmem:[#allocation1] sm:$0xff pattern:$0x75316420]
      %v499 = vld.sshfl [vmem:[#allocation1 + $0x8] sm:$0xff pattern:$0x75316420]
      %v502 = vsel %vm316, %v498, 0.0
      %v503 = vsel %vm316, %v499, 0.0
      %v504 = vadd.f32 %v502, %v503
      %505 = vadd.xlane.f32.xlu0 %v504
      %v506 = vpop.xlane.xlu0 %505
      %v507 = vrot.slane %v506, 4
      %v508 = vadd.f32 %v506, %v507
      %v509 = vrot.slane %v508, 2
      %v510 = vadd.f32 %v508, %v509
      %v511 = vrot.slane %v510, 1
      %v512 = vadd.f32 %v510, %v511
      %s513 = vtos %v512
      %514 = vst [vmem:[#allocation1] ss:$2 sm:$0xff] %v230
      %v515 = vld.sshfl [vmem:[#allocation1] sm:$0xff pattern:$0x75316420]
      %v516 = vld.sshfl [vmem:[#allocation1 + $0x8] sm:$0xff pattern:$0x75316420]
      %v519 = vsel %vm316, %v515, 0.0
      %v520 = vsel %vm316, %v516, 0.0
      %v521 = vadd.f32 %v519, %v520
      %522 = vadd.xlane.f32.xlu0 %v521
      %v523 = vpop.xlane.xlu0 %522
      %v524 = vrot.slane %v523, 4
      %v525 = vadd.f32 %v523, %v524
      %v526 = vrot.slane %v525, 2
      %v527 = vadd.f32 %v525, %v526
      %v528 = vrot.slane %v527, 1
      %v529 = vadd.f32 %v527, %v528
      %s530 = vtos %v529
      %v531 = vmul.f32 %v269, %v230
      %533 = vst [vmem:[#allocation1] ss:$2 sm:$0xff] %v531
      %v534 = vld.sshfl [vmem:[#allocation1] sm:$0xff pattern:$0x75316420]
      %v535 = vld.sshfl [vmem:[#allocation1 + $0x8] sm:$0xff pattern:$0x75316420]
      %v538 = vsel %vm316, %v534, 0.0
      %v539 = vsel %vm316, %v535, 0.0
      %v540 = vadd.f32 %v538, %v539
      %541 = vadd.xlane.f32.xlu0 %v540
      %v542 = vpop.xlane.xlu0 %541
      %v543 = vrot.slane %v542, 4
      %v544 = vadd.f32 %v542, %v543
      %v545 = vrot.slane %v544, 2
      %v546 = vadd.f32 %v544, %v545
      %v547 = vrot.slane %v546, 1
      %v548 = vadd.f32 %v546, %v547
      %s549 = vtos %v548
      %s550 = ssub.f32 %s530, %s549
      %551 = vst [vmem:[#allocation1] ss:$2 sm:$0xff] %v269
      %v552 = vld.sshfl [vmem:[#allocation1] sm:$0xff pattern:$0x75316420]
      %v553 = vld.sshfl [vmem:[#allocation1 + $0x8] sm:$0xff pattern:$0x75316420]
      %v556 = vsel %vm316, %v552, 0.0
      %v557 = vsel %vm316, %v553, 0.0
      %v558 = vadd.f32 %v556, %v557
      %559 = vadd.xlane.f32.xlu0 %v558
      %v560 = vpop.xlane.xlu0 %559
      %v561 = vrot.slane %v560, 4
      %v562 = vadd.f32 %v560, %v561
      %v563 = vrot.slane %v562, 2
      %v564 = vadd.f32 %v562, %v563
      %v565 = vrot.slane %v564, 1
      %v566 = vadd.f32 %v564, %v565
      %s567 = vtos %v566
      %s568 = ssub.f32 1024.0, %s567
      %vm569 = vcmp.eq.s32.totalorder %v281, 0
      %v570 = vstv %s477
      %v571 = vsel %vm569, %v570, 0.0
      %vm572 = vcmp.eq.s32.totalorder %v281, 1
      %v573 = vstv %s495
      %v574 = vsel %vm572, %v573, 0.0
      %v575 = vadd.f32 %v571, %v574
      %vm576 = vcmp.eq.s32.totalorder %v281, 2
      %v577 = vstv %s513
      %v578 = vsel %vm576, %v577, 0.0
      %v579 = vadd.f32 %v575, %v578
      %vm580 = vcmp.eq.s32.totalorder %v281, 3
      %v581 = vstv %s550
      %v582 = vsel %vm580, %v581, 0.0
      %v583 = vadd.f32 %v579, %v582
      %vm584 = vcmp.eq.s32.totalorder %v281, 4
      %v585 = vstv %s568
      %v586 = vsel %vm584, %v585, 0.0
      %v587 = vadd.f32 %v583, %v586
      %vm588 = vcmp.eq.s32.totalorder %v281, 5
      %v589 = vstv %s530
      %v590 = vsel %vm588, %v589, 0.0
      %v591 = vadd.f32 %v587, %v590
      %p592 = scmp.eq.s32.totalorder %s19, 0
      // Predicated region
      $region33: #{_boundary_dice_impl.1} parent=31 // pred_check
        %p593 = pneg %p592
      $region34: #{_boundary_dice_impl.1} parent=31 // pred_check_branch
        %595 = sbr.rel (%p593) target = $region36
      $region35: #{_boundary_dice_impl.1} parent=31 // pred_region
        %596 = vst [vmem:[%s228] sm:$0xff] %v591
      $region36: #{_boundary_dice_impl.1} parent=31 // pred_fallthru
        _
      %p597 = scmp.gt.s32.totalorder %s19, 0
      // Predicated region
      $region37: #{_boundary_dice_impl.1} parent=31 // pred_check
        %p598 = pneg %p597
      $region38: #{_boundary_dice_impl.1} parent=31 // pred_check_branch
        %600 = sbr.rel (%p598) target = $region40
      $region39: #{_boundary_dice_impl.1} parent=31 // pred_region
        %v601 = vld [vmem:[%s228] sm:$0xff]
        %v602 = vadd.f32 %v601, %v591
        %603 = vst [vmem:[%s228] sm:$0xff] %v602
      $region40: #{_boundary_dice_impl.1} parent=31 // pred_fallthru
        _
      %p604 = scmp.lt.s32.totalorder %s18, 1
      %s605 = scalar_select %p604, %s18, 1
      %s606 = smul.addr %s605, 8
      %s607 = scalar_lea.vmem %s3, %s606
      // Predicated region
      $region41: #{_boundary_dice_impl.1} parent=31 // pred_check
        %p608 = pneg %p121
      $region42: #{_boundary_dice_impl.1} parent=31 // pred_check_branch
        %610 = sbr.rel (%p608) target = $region44
      $region43: #{_boundary_dice_impl.1} parent=31 // pred_region
        _
      $region44: #{_boundary_dice_impl.1} parent=31 // pred_fallthru
        _
    $region32: #{_boundary_dice_impl.1} parent=5 // pred_fallthru
      _
    %p611 = scmp.le.s32.totalorder 2, %s9
    // Predicated region
    $region45: #{_boundary_dice_impl.1} parent=5 // pred_check
      %p612 = pneg %p611
    $region46: #{_boundary_dice_impl.1} parent=5 // pred_check_branch
      %614 = sbr.rel (%p612) target = $region48
    $region47: #{_boundary_dice_impl.1} parent=5 // pred_region
      %s615 = ssub.s32 %s9, 2
      // Predicated region
      $region49: #{_boundary_dice_impl.1} parent=47 // pred_check
        %p616 = pneg %p127
      $region50: #{_boundary_dice_impl.1} parent=47 // pred_check_branch
        %618 = sbr.rel (%p616) target = $region52
      $region51: #{_boundary_dice_impl.1} parent=47 // pred_region
        %p619 = scmp.lt.s32.totalorder %s20, 1
        %s620 = scalar_select %p619, %s20, 1
        %s621 = smul.addr %s620, 8
        %s622 = scalar_lea.vmem %s3, %s621
      $region52: #{_boundary_dice_impl.1} parent=47 // pred_fallthru
        _
    $region48: #{_boundary_dice_impl.1} parent=5 // pred_fallthru
      _
  $region6: #{_boundary_dice_impl.1} parent=0 // loop_footer
    %s13 = sadd.s32 1, %s9
  $region7: #{_boundary_dice_impl.1} parent=0 // loop_footer_branch
    %8 = sbr.rel target = $region3
  $region8: #{_boundary_dice_impl.1} parent=0 // loop_exit
    _

// kernel: _boundary_dice_impl.1
$region0: #{_boundary_dice_impl.1}
  #allocation0 [shape = 'u32[]', space=smem, size = 0x4, offset = 0x4, fixed_abs, tag = 'smem constant byte address 0x4 - core index']
  #allocation1 [shape = 'u32[72,128]{1,0:T(1,128)}', space=vmem, size = 0x9000, scoped, tag = 'internal scratch']
  %s0 = inlined_call_operand.vmem [shape: f32[4,256], index: 0, kind: input, shape index: {}]
  %s1 = inlined_call_operand.vmem [shape: f32[2,4,256], index: 1, kind: input, shape index: {}]
  %s2 = inlined_call_operand.vmem [shape: f32[2,4,256], index: 2, kind: input, shape index: {}]
  %s3 = inlined_call_operand.vmem [shape: f32[2,8,128], index: 3, kind: output, shape index: {}]
  %s4 = sld [smem:[#allocation0]]
  $region53: #{_boundary_dice_impl.1} parent=0
    _
  %s6 = ssub.s32 1, %s4
  %s7 = scalar_select 0, %s6, %s4
  loop: start=0, step=1, limit=4
  $region2: #{_boundary_dice_impl.1} parent=0 // loop_pre_header
    _
  $region3: #{_boundary_dice_impl.1} parent=0 // loop_header
    %s9 = sphi 0, %s13
    %p10 = scmp.ge.s32.totalorder %s9, 4
    %s16 = sphi 0, %s28
    %s17 = sphi 0, %s24
    %s18 = sphi 0, %s16
    %s19 = sphi 0, %s17
    %s20 = sphi 0, %s18
    %s21 = sphi 0, %s19
    %s29 = sphi 0, %s29
    %s31 = sphi 0, %s29
    %s32 = sphi 0, %s31
    %s46 = sphi 0, %s32
    %s54 = sphi 0, %s56
    %s57 = sphi 0, %s54
    %s58 = sphi 0, %s57
    %s74 = sphi 0, %s58
    %s82 = sphi 0, %s84
    %s85 = sphi 0, %s82
    %s86 = sphi 0, %s85
    %s102 = sphi 0, %s86
    %s108 = sphi 0, %s110
    %s111 = sphi 0, %s108
    %s112 = sphi 0, %s111
    %s128 = sphi 0, %s112
  $region4: #{_boundary_dice_impl.1} parent=0 // loop_header_branch
    %12 = sbr.rel (%p10) target = $region8
  $region5: #{_boundary_dice_impl.1} parent=0 // loop_body
    %s14 = ssub.s32 %s9, 1
    %s15 = ssub.s32 %s9, 2
    %s22 = sadd.s32 1, %s17
    %p23 = scmp.ge.s32.totalorder %s22, 1
    %s24 = scalar_select %p23, 0, %s22
    %s25 = sadd.s32 1, %s16
    %s26 = scalar_select %p23, %s25, %s16
    %p27 = scmp.ge.s32.totalorder %s26, 2
    %s28 = scalar_select %p27, 0, %s26
    %s30 = sadd.s32 %s29, 1
    %p33 = scmp.eq.s32.totalorder %s9, 1
    %p34 = scmp.ne.s32.totalorder %s29, %s31
    %p35 = scmp.eq.s32.totalorder %s9, 0
    %p36 = por %p34, %p35
    %p37 = scmp.ne.s32.totalorder %s29, %s31
    %p38 = scmp.eq.s32.totalorder %s14, 1
    %p39 = por %p37, %p38
    %p40 = scmp.ne.s32.totalorder %s31, %s32
    %p41 = scmp.eq.s32.totalorder %s14, 0
    %p42 = por %p40, %p41
    %p43 = scmp.ne.s32.totalorder %s31, %s32
    %p44 = scmp.eq.s32.totalorder %s15, 1
    %p45 = por %p43, %p44
    %p47 = scmp.ne.s32.totalorder %s32, %s46
    %p48 = scmp.eq.s32.totalorder %s15, 0
    %p49 = por %p47, %p48
    %s50 = ssub.s32 %s16, %s28
    %s51 = ssub.s32 %s17, %s24
    %s52 = sor.u32 %s50, %s51
    %p53 = scmp.eq.s32.totalorder %s52, 0
    %s55 = sadd.s32 %s54, 1
    %s56 = scalar_select %p53, %s54, %s55
    %p59 = pneg %p53
    %p60 = scmp.eq.s32.totalorder %s9, 1
    %p61 = por %p59, %p60
    %p62 = scmp.ne.s32.totalorder %s54, %s57
    %p63 = scmp.eq.s32.totalorder %s9, 0
    %p64 = por %p62, %p63
    %p65 = scmp.ne.s32.totalorder %s54, %s57
    %p66 = scmp.eq.s32.totalorder %s14, 1
    %p67 = por %p65, %p66
    %p68 = scmp.ne.s32.totalorder %s57, %s58
    %p69 = scmp.eq.s32.totalorder %s14, 0
    %p70 = por %p68, %p69
    %p71 = scmp.ne.s32.totalorder %s57, %s58
    %p72 = scmp.eq.s32.totalorder %s15, 1
    %p73 = por %p71, %p72
    %p75 = scmp.ne.s32.totalorder %s58, %s74
    %p76 = scmp.eq.s32.totalorder %s15, 0
    %p77 = por %p75, %p76
    %s78 = ssub.s32 %s16, %s28
    %s79 = ssub.s32 %s17, %s24
    %s80 = sor.u32 %s78, %s79
    %p81 = scmp.eq.s32.totalorder %s80, 0
    %s83 = sadd.s32 %s82, 1
    %s84 = scalar_select %p81, %s82, %s83
    %p87 = pneg %p81
    %p88 = scmp.eq.s32.totalorder %s9, 1
    %p89 = por %p87, %p88
    %p90 = scmp.ne.s32.totalorder %s82, %s85
    %p91 = scmp.eq.s32.totalorder %s9, 0
    %p92 = por %p90, %p91
    %p93 = scmp.ne.s32.totalorder %s82, %s85
    %p94 = scmp.eq.s32.totalorder %s14, 1
    %p95 = por %p93, %p94
    %p96 = scmp.ne.s32.totalorder %s85, %s86
    %p97 = scmp.eq.s32.totalorder %s14, 0
    %p98 = por %p96, %p97
    %p99 = scmp.ne.s32.totalorder %s85, %s86
    %p100 = scmp.eq.s32.totalorder %s15, 1
    %p101 = por %p99, %p100
    %p103 = scmp.ne.s32.totalorder %s86, %s102
    %p104 = scmp.eq.s32.totalorder %s15, 0
    %p105 = por %p103, %p104
    %s106 = ssub.s32 %s16, %s28
    %p107 = scmp.eq.s32.totalorder %s106, 0
    %s109 = sadd.s32 %s108, 1
    %s110 = scalar_select %p107, %s108, %s109
    %p113 = pneg %p107
    %p114 = scmp.eq.s32.totalorder %s9, 1
    %p115 = por %p113, %p114
    %p116 = scmp.ne.s32.totalorder %s108, %s111
    %p117 = scmp.eq.s32.totalorder %s9, 0
    %p118 = por %p116, %p117
    %p119 = scmp.ne.s32.totalorder %s108, %s111
    %p120 = scmp.eq.s32.totalorder %s14, 1
    %p121 = por %p119, %p120
    %p122 = scmp.ne.s32.totalorder %s111, %s112
    %p123 = scmp.eq.s32.totalorder %s14, 0
    %p124 = por %p122, %p123
    %p125 = scmp.ne.s32.totalorder %s111, %s112
    %p126 = scmp.eq.s32.totalorder %s15, 1
    %p127 = por %p125, %p126
    %p129 = scmp.ne.s32.totalorder %s112, %s128
    %p130 = scmp.eq.s32.totalorder %s15, 0
    %p131 = por %p129, %p130
    %p132 = scmp.le.s32.totalorder 1, %s9
    %p133 = scmp.lt.s32.totalorder %s9, 3
    %p134 = pnand %p132, %p133
    %p135 = pneg %p134
    // Predicated region
    $region9: #{_boundary_dice_impl.1} parent=5 // pred_check
      _
    $region10: #{_boundary_dice_impl.1} parent=5 // pred_check_branch
      %137 = sbr.rel (%p134) target = $region12
    $region11: #{_boundary_dice_impl.1} parent=5 // pred_region
      %s138 = ssub.s32 %s9, 1
      // Predicated region
      $region13: #{_boundary_dice_impl.1} parent=11 // pred_check
        %p139 = pneg %p42
      $region14: #{_boundary_dice_impl.1} parent=11 // pred_check_branch
        %141 = sbr.rel (%p139) target = $region16
      $region15: #{_boundary_dice_impl.1} parent=11 // pred_region
        _
      $region16: #{_boundary_dice_impl.1} parent=11 // pred_fallthru
        _
    $region12: #{_boundary_dice_impl.1} parent=5 // pred_fallthru
      _
    %p142 = scmp.lt.s32.totalorder %s9, 2
    // Predicated region
    $region17: #{_boundary_dice_impl.1} parent=5 // pred_check
      %p143 = pneg %p142
    $region18: #{_boundary_dice_impl.1} parent=5 // pred_check_branch
      %145 = sbr.rel (%p143) target = $region20
    $region19: #{_boundary_dice_impl.1} parent=5 // pred_region
      // Predicated region
      $region21: #{_boundary_dice_impl.1} parent=19 // pred_check
        %p146 = pneg %p64
      $region22: #{_boundary_dice_impl.1} parent=19 // pred_check_branch
        %148 = sbr.rel (%p146) target = $region24
      $region23: #{_boundary_dice_impl.1} parent=19 // pred_region
        %p149 = scmp.lt.s32.totalorder %s16, 1
        %s150 = scalar_select %p149, %s16, 1
        %p151 = scmp.lt.s32.totalorder %s17, 0
        %s152 = scalar_select %p151, %s17, 0
        %s153 = smul.addr %s152, 2
        %s154 = smul.addr %s150, 2
        %s155 = sadd.s32 %s153, %s154
        %s156 = smul.addr %s155, 4
        %s157 = scalar_lea.vmem %s1, %s156
      $region24: #{_boundary_dice_impl.1} parent=19 // pred_fallthru
        _
      // Predicated region
      $region25: #{_boundary_dice_impl.1} parent=19 // pred_check
        %p158 = pneg %p92
      $region26: #{_boundary_dice_impl.1} parent=19 // pred_check_branch
        %160 = sbr.rel (%p158) target = $region28
      $region27: #{_boundary_dice_impl.1} parent=19 // pred_region
        %p161 = scmp.lt.s32.totalorder %s16, 1
        %s162 = scalar_select %p161, %s16, 1
        %p163 = scmp.lt.s32.totalorder %s17, 0
        %s164 = scalar_select %p163, %s17, 0
        %s165 = smul.addr %s164, 2
        %s166 = smul.addr %s162, 2
        %s167 = sadd.s32 %s165, %s166
        %s168 = smul.addr %s167, 4
        %s169 = scalar_lea.vmem %s2, %s168
      $region28: #{_boundary_dice_impl.1} parent=19 // pred_fallthru
        _
    $region20: #{_boundary_dice_impl.1} parent=5 // pred_fallthru
      _
    %p170 = scmp.le.s32.totalorder 1, %s9
    %p171 = scmp.lt.s32.totalorder %s9, 3
    %p172 = pnand %p170, %p171
    %p173 = pneg %p172
    // Predicated region
    $region29: #{_boundary_dice_impl.1} parent=5 // pred_check
      _
    $region30: #{_boundary_dice_impl.1} parent=5 // pred_check_branch
      %175 = sbr.rel (%p172) target = $region32
    $region31: #{_boundary_dice_impl.1} parent=5 // pred_region
      %s176 = ssub.s32 %s9, 1
      %p177 = pneg %p42
      %p178 = pneg %p39
      %p179 = scmp.lt.s32.totalorder %s18, 1
      %s180 = scalar_select %p179, %s18, 1
      %p181 = scmp.lt.s32.totalorder %s19, 0
      %s182 = scalar_select %p181, %s19, 0
      %s183 = smul.addr %s182, 2
      %s184 = smul.addr %s180, 2
      %s185 = sadd.s32 %s183, %s184
      %s186 = smul.addr %s185, 4
      %s187 = scalar_lea.vmem %s1, %s186
      %p188 = pneg %p70
      %p189 = pneg %p67
      %p190 = scmp.lt.s32.totalorder %s18, 1
      %s191 = scalar_select %p190, %s18, 1
      %p192 = scmp.lt.s32.totalorder %s19, 0
      %s193 = scalar_select %p192, %s19, 0
      %s194 = smul.addr %s193, 2
      %s195 = smul.addr %s191, 2
      %s196 = sadd.s32 %s194, %s195
      %s197 = smul.addr %s196, 4
      %s198 = scalar_lea.vmem %s2, %s197
      %p199 = pneg %p98
      %p200 = pneg %p95
      %p201 = pneg %p124
      %p202 = pneg %p121
      %p203 = scmp.lt.s32.totalorder %s18, 1
      %s204 = scalar_select %p203, %s18, 1
      %s205 = smul.addr %s204, 8
      %s206 = scalar_lea.vmem %s3, %s205
      %p207 = scmp.lt.s32.totalorder %s18, 1
      %s208 = scalar_select %p207, %s18, 1
      %p209 = scmp.lt.s32.totalorder %s19, 0
      %s210 = scalar_select %p209, %s19, 0
      %s211 = smul.addr %s210, 2
      %s212 = smul.addr %s208, 2
      %s213 = sadd.s32 %s211, %s212
      %s214 = smul.addr %s213, 4
      %s215 = scalar_lea.vmem %s1, %s214
      %p216 = scmp.lt.s32.totalorder %s18, 1
      %s217 = scalar_select %p216, %s18, 1
      %p218 = scmp.lt.s32.totalorder %s19, 0
      %s219 = scalar_select %p218, %s19, 0
      %s220 = smul.addr %s219, 2
      %s221 = smul.addr %s217, 2
      %s222 = sadd.s32 %s220, %s221
      %s223 = smul.addr %s222, 4
      %s224 = scalar_lea.vmem %s2, %s223
      %p225 = scmp.lt.s32.totalorder %s18, 1
      %s226 = scalar_select %p225, %s18, 1
      %s227 = smul.addr %s226, 8
      %s228 = scalar_lea.vmem %s3, %s227
      %v229 = vld [vmem:[%s215] sm:$0xff]
      %v230 = vld [vmem:[%s224] sm:$0xff]
      %v231 = vld [vmem:[%s0] ss:$4 sm:$0x3]
      %v233 = vperm.slane %v231, 0
      %v234 = vperm.slane %v231, 1
      %vm237 = vcmp.gt.f32.partialorder %v233, 0.0
      %vm238 = vcmp.gt.f32.partialorder %v234, 0.0
      %s239 = scalar_lea.vmem %s0, 1
      %v240 = vld [vmem:[%s239] ss:$4 sm:$0x3]
      %v242 = vperm.slane %v240, 0
      %v243 = vperm.slane %v240, 1
      %vm246 = vcmp.gt.f32.partialorder %v242, 0.0
      %vm247 = vcmp.gt.f32.partialorder %v243, 0.0
      %s248 = scalar_lea.vmem %s0, 2
      %v249 = vld [vmem:[%s248] ss:$4 sm:$0x3]
      %v251 = vperm.slane %v249, 0
      %v252 = vperm.slane %v249, 1
      %vm255 = vcmp.gt.f32.partialorder %v251, 0.0
      %vm256 = vcmp.gt.f32.partialorder %v252, 0.0
      %s257 = scalar_lea.vmem %s0, 3
      %v258 = vld [vmem:[%s257] ss:$4 sm:$0x3]
      %v260 = vperm.slane %v258, 0
      %v261 = vperm.slane %v258, 1
      %vm264 = vcmp.gt.f32.partialorder %v260, 0.0
      %vm265 = vcmp.gt.f32.partialorder %v261, 0.0
      %v266 = vmul.f32 %v229, 0.5
      %v267 = vtanh.pop %v266
      %v268 = vmul.f32 %v267, 0.5
      %v269 = vsub.f32 0.5, %v268
      %271 = vst [vmem:[#allocation1] ss:$2 sm:$0xff] %v269
      %v272 = vld.sshfl [vmem:[#allocation1 + $0x8] sm:$0xff pattern:$0x75316420]
      %273 = vrot.lane.b32.xlu0 %v272, 1
      %v274 = vpop.permute.xlu0 %273
      %276 = vst [vmem:[#allocation1] ss:$2 sm:$0xff] %v269
      %v277 = vld.sshfl [vmem:[#allocation1] sm:$0xff pattern:$0x75316420]
      %v278 = vld.sshfl [vmem:[#allocation1 + $0x8] sm:$0xff pattern:$0x75316420]
      %279 = vrot.lane.b32.xlu0 %v277, 1
      %v280 = vpop.permute.xlu0 %279
      %281 = vrot.lane.b32.xlu0 %v278, 1
      %v282 = vpop.permute.xlu0 %281
      %vm283 = vcmask 7168
      %v284 = vsel %vm283, %v280, %v282
      %v287 = vsel %vm283, %v274, %v280
      %288 = vst [vmem:[#allocation1] ss:$2 sm:$0xff] %v269
      %v289 = vld.sshfl [vmem:[#allocation1] sm:$0xff pattern:$0x75316420]
      %v290 = vld.sshfl [vmem:[#allocation1 + $0x8] sm:$0xff pattern:$0x75316420]
      %v293 = vsel %vm237, %v289, %v287
      %v294 = vsel %vm238, %v290, %v284
      %295 = vst [vmem:[#allocation1] ss:$2 sm:$0xff] %v269
      %v296 = vld.sshfl [vmem:[#allocation1] sm:$0xff pattern:$0x75316420]
      %v297 = vld.sshfl [vmem:[#allocation1 + $0x8] sm:$0xff pattern:$0x75316420]
      %298 = vrot.lane.b32.xlu0 %v296, 127
      %v299 = vpop.permute.xlu0 %298
      %300 = vrot.lane.b32.xlu0 %v297, 127
      %v301 = vpop.permute.xlu0 %300
      %vm302 = vcmask 1039360
      %v303 = vsel %vm302, %v299, %v301
      %306 = vst [vmem:[#allocation1] ss:$2 sm:$0xff] %v269
      %v307 = vld.sshfl [vmem:[#allocation1] sm:$0xff pattern:$0x75316420]
      %308 = vrot.lane.b32.xlu0 %v307, 127
      %v309 = vpop.permute.xlu0 %308
      %v311 = vsel %vm302, %v301, %v309
      %312 = vst [vmem:[#allocation1] ss:$2 sm:$0xff] %v269
      %v313 = vld.sshfl [vmem:[#allocation1] sm:$0xff pattern:$0x75316420]
      %v314 = vld.sshfl [vmem:[#allocation1 + $0x8] sm:$0xff pattern:$0x75316420]
      %v317 = vsel %vm246, %v313, %v303
      %v318 = vsel %vm247, %v314, %v311
      %v319 = vmax.f32 %v293, %v317
      %v320 = vmax.f32 %v294, %v318
      %v323 = vrot.slane %v320, 4
      %vm324 = vcmask 1043456
      %v325 = vsel %vm324, %v319, %v323
      %v327 = vmax.f32 %v269, %v325
      %329 = vst [vmem:[#allocation1] ss:$2 sm:$0xff] %v327
      %v330 = vld.sshfl [vmem:[#allocation1 + $0x8] sm:$0xff pattern:$0x75316420]
      %331 = vrot.lane.b32.xlu0 %v330, 16
      %v332 = vpop.permute.xlu0 %331
      %334 = vst [vmem:[#allocation1] ss:$2 sm:$0xff] %v327
      %v335 = vld.sshfl [vmem:[#allocation1] sm:$0xff pattern:$0x75316420]
      %v336 = vld.sshfl [vmem:[#allocation1 + $0x8] sm:$0xff pattern:$0x75316420]
      %337 = vrot.lane.b32.xlu0 %v335, 16
      %v338 = vpop.permute.xlu0 %337
      %339 = vrot.lane.b32.xlu0 %v336, 16
      %v340 = vpop.permute.xlu0 %339
      %vm341 = vcmask 130048
      %v342 = vsel %vm341, %v338, %v340
      %v345 = vsel %vm341, %v332, %v338
      %346 = vst [vmem:[#allocation1] ss:$2 sm:$0xff] %v327
      %v347 = vld.sshfl [vmem:[#allocation1] sm:$0xff pattern:$0x75316420]
      %v348 = vld.sshfl [vmem:[#allocation1 + $0x8] sm:$0xff pattern:$0x75316420]
      %v351 = vsel %vm255, %v347, %v345
      %v352 = vsel %vm256, %v348, %v342
      %353 = vst [vmem:[#allocation1] ss:$2 sm:$0xff] %v327
      %v354 = vld.sshfl [vmem:[#allocation1] sm:$0xff pattern:$0x75316420]
      %v355 = vld.sshfl [vmem:[#allocation1 + $0x8] sm:$0xff pattern:$0x75316420]
      %356 = vrot.lane.b32.xlu0 %v354, 112
      %v357 = vpop.permute.xlu0 %356
      %358 = vrot.lane.b32.xlu0 %v355, 112
      %v359 = vpop.permute.xlu0 %358
      %vm360 = vcmask 916480
      %v361 = vsel %vm360, %v357, %v359
      %364 = vst [vmem:[#allocation1] ss:$2 sm:$0xff] %v327
      %v365 = vld.sshfl [vmem:[#allocation1] sm:$0xff pattern:$0x75316420]
      %366 = vrot.lane.b32.xlu0 %v365, 112
      %v367 = vpop.permute.xlu0 %366
      %v369 = vsel %vm360, %v359, %v367
      %370 = vst [vmem:[#allocation1] ss:$2 sm:$0xff] %v327
      %v371 = vld.sshfl [vmem:[#allocation1] sm:$0xff pattern:$0x75316420]
      %v372 = vld.sshfl [vmem:[#allocation1 + $0x8] sm:$0xff pattern:$0x75316420]
      %v375 = vsel %vm264, %v371, %v361
      %v376 = vsel %vm265, %v372, %v369
      %v377 = vmax.f32 %v351, %v375
      %v378 = vmax.f32 %v352, %v376
      %v381 = vrot.slane %v378, 4
      %v382 = vsel %vm324, %v377, %v381
      %v384 = vmax.f32 %v327, %v382
      %v385 = vsub.f32 %v384, %v269
      %387 = vst [vmem:[#allocation1] ss:$2 sm:$0xff] %v230
      %v388 = vld.sshfl [vmem:[#allocation1 + $0x8] sm:$0xff pattern:$0x75316420]
      %389 = vrot.lane.b32.xlu0 %v388, 1
      %v390 = vpop.permute.xlu0 %389
      %392 = vst [vmem:[#allocation1] ss:$2 sm:$0xff] %v230
      %v393 = vld.sshfl [vmem:[#allocation1] sm:$0xff pattern:$0x75316420]
      %v394 = vld.sshfl [vmem:[#allocation1 + $0x8] sm:$0xff pattern:$0x75316420]
      %395 = vrot.lane.b32.xlu0 %v393, 1
      %v396 = vpop.permute.xlu0 %395
      %397 = vrot.lane.b32.xlu0 %v394, 1
      %v398 = vpop.permute.xlu0 %397
      %v399 = vsel %vm283, %v396, %v398
      %v402 = vsel %vm283, %v390, %v396
      %403 = vst [vmem:[#allocation1] ss:$2 sm:$0xff] %v230
      %v404 = vld.sshfl [vmem:[#allocation1] sm:$0xff pattern:$0x75316420]
      %v405 = vld.sshfl [vmem:[#allocation1 + $0x8] sm:$0xff pattern:$0x75316420]
      %v408 = vsel %vm237, %v404, %v402
      %v409 = vsel %vm238, %v405, %v399
      %410 = vst [vmem:[#allocation1] ss:$2 sm:$0xff] %v230
      %v411 = vld.sshfl [vmem:[#allocation1] sm:$0xff pattern:$0x75316420]
      %v412 = vld.sshfl [vmem:[#allocation1 + $0x8] sm:$0xff pattern:$0x75316420]
      %413 = vrot.lane.b32.xlu0 %v411, 127
      %v414 = vpop.permute.xlu0 %413
      %415 = vrot.lane.b32.xlu0 %v412, 127
      %v416 = vpop.permute.xlu0 %415
      %v417 = vsel %vm302, %v414, %v416
      %420 = vst [vmem:[#allocation1] ss:$2 sm:$0xff] %v230
      %v421 = vld.sshfl [vmem:[#allocation1] sm:$0xff pattern:$0x75316420]
      %422 = vrot.lane.b32.xlu0 %v421, 127
      %v423 = vpop.permute.xlu0 %422
      %v425 = vsel %vm302, %v416, %v423
      %426 = vst [vmem:[#allocation1] ss:$2 sm:$0xff] %v230
      %v427 = vld.sshfl [vmem:[#allocation1] sm:$0xff pattern:$0x75316420]
      %v428 = vld.sshfl [vmem:[#allocation1 + $0x8] sm:$0xff pattern:$0x75316420]
      %v431 = vsel %vm246, %v427, %v417
      %v432 = vsel %vm247, %v428, %v425
      %v433 = vmin.f32 %v408, %v431
      %v434 = vmin.f32 %v409, %v432
      %v437 = vrot.slane %v434, 4
      %v438 = vsel %vm324, %v433, %v437
      %v440 = vmin.f32 %v230, %v438
      %442 = vst [vmem:[#allocation1] ss:$2 sm:$0xff] %v440
      %v443 = vld.sshfl [vmem:[#allocation1 + $0x8] sm:$0xff pattern:$0x75316420]
      %444 = vrot.lane.b32.xlu0 %v443, 16
      %v445 = vpop.permute.xlu0 %444
      %447 = vst [vmem:[#allocation1] ss:$2 sm:$0xff] %v440
      %v448 = vld.sshfl [vmem:[#allocation1] sm:$0xff pattern:$0x75316420]
      %v449 = vld.sshfl [vmem:[#allocation1 + $0x8] sm:$0xff pattern:$0x75316420]
      %450 = vrot.lane.b32.xlu0 %v448, 16
      %v451 = vpop.permute.xlu0 %450
      %452 = vrot.lane.b32.xlu0 %v449, 16
      %v453 = vpop.permute.xlu0 %452
      %v454 = vsel %vm341, %v451, %v453
      %v457 = vsel %vm341, %v445, %v451
      %458 = vst [vmem:[#allocation1] ss:$2 sm:$0xff] %v440
      %v459 = vld.sshfl [vmem:[#allocation1] sm:$0xff pattern:$0x75316420]
      %v460 = vld.sshfl [vmem:[#allocation1 + $0x8] sm:$0xff pattern:$0x75316420]
      %v463 = vsel %vm255, %v459, %v457
      %v464 = vsel %vm256, %v460, %v454
      %465 = vst [vmem:[#allocation1] ss:$2 sm:$0xff] %v440
      %v466 = vld.sshfl [vmem:[#allocation1] sm:$0xff pattern:$0x75316420]
      %v467 = vld.sshfl [vmem:[#allocation1 + $0x8] sm:$0xff pattern:$0x75316420]
      %468 = vrot.lane.b32.xlu0 %v466, 112
      %v469 = vpop.permute.xlu0 %468
      %470 = vrot.lane.b32.xlu0 %v467, 112
      %v471 = vpop.permute.xlu0 %470
      %v472 = vsel %vm360, %v469, %v471
      %475 = vst [vmem:[#allocation1] ss:$2 sm:$0xff] %v440
      %v476 = vld.sshfl [vmem:[#allocation1] sm:$0xff pattern:$0x75316420]
      %477 = vrot.lane.b32.xlu0 %v476, 112
      %v478 = vpop.permute.xlu0 %477
      %v480 = vsel %vm360, %v471, %v478
      %481 = vst [vmem:[#allocation1] ss:$2 sm:$0xff] %v440
      %v482 = vld.sshfl [vmem:[#allocation1] sm:$0xff pattern:$0x75316420]
      %v483 = vld.sshfl [vmem:[#allocation1 + $0x8] sm:$0xff pattern:$0x75316420]
      %v486 = vsel %vm264, %v482, %v472
      %v487 = vsel %vm265, %v483, %v480
      %v488 = vmin.f32 %v463, %v486
      %v489 = vmin.f32 %v464, %v487
      %v492 = vrot.slane %v489, 4
      %v493 = vsel %vm324, %v488, %v492
      %v495 = vmin.f32 %v440, %v493
      %v496 = vsub.f32 %v230, %v495
      %v497 = vmul.f32 %v496, %v385
      %499 = vst [vmem:[#allocation1] ss:$2 sm:$0xff] %v497
      %v500 = vld.sshfl [vmem:[#allocation1] sm:$0xff pattern:$0x75316420]
      %v501 = vld.sshfl [vmem:[#allocation1 + $0x8] sm:$0xff pattern:$0x75316420]
      %v504 = vsel %vm324, %v500, 0.0
      %v505 = vsel %vm324, %v501, 0.0
      %v506 = vadd.f32 %v504, %v505
      %507 = vadd.xlane.f32.xlu0 %v506
      %v508 = vpop.xlane.xlu0 %507
      %v509 = vrot.slane %v508, 4
      %v510 = vadd.f32 %v508, %v509
      %v511 = vrot.slane %v510, 2
      %v512 = vadd.f32 %v510, %v511
      %v513 = vrot.slane %v512, 1
      %v514 = vadd.f32 %v512, %v513
      %s515 = vtos %v514
      %517 = vst [vmem:[#allocation1] ss:$2 sm:$0xff] %v385
      %v518 = vld.sshfl [vmem:[#allocation1] sm:$0xff pattern:$0x75316420]
      %v519 = vld.sshfl [vmem:[#allocation1 + $0x8] sm:$0xff pattern:$0x75316420]
      %v522 = vsel %vm324, %v518, 0.0
      %v523 = vsel %vm324, %v519, 0.0
      %v524 = vadd.f32 %v522, %v523
      %525 = vadd.xlane.f32.xlu0 %v524
      %v526 = vpop.xlane.xlu0 %525
      %v527 = vrot.slane %v526, 4
      %v528 = vadd.f32 %v526, %v527
      %v529 = vrot.slane %v528, 2
      %v530 = vadd.f32 %v528, %v529
      %v531 = vrot.slane %v530, 1
      %v532 = vadd.f32 %v530, %v531
      %s533 = vtos %v532
      %535 = vst [vmem:[#allocation1] ss:$2 sm:$0xff] %v496
      %v536 = vld.sshfl [vmem:[#allocation1] sm:$0xff pattern:$0x75316420]
      %v537 = vld.sshfl [vmem:[#allocation1 + $0x8] sm:$0xff pattern:$0x75316420]
      %v540 = vsel %vm324, %v536, 0.0
      %v541 = vsel %vm324, %v537, 0.0
      %v542 = vadd.f32 %v540, %v541
      %543 = vadd.xlane.f32.xlu0 %v542
      %v544 = vpop.xlane.xlu0 %543
      %v545 = vrot.slane %v544, 4
      %v546 = vadd.f32 %v544, %v545
      %v547 = vrot.slane %v546, 2
      %v548 = vadd.f32 %v546, %v547
      %v549 = vrot.slane %v548, 1
      %v550 = vadd.f32 %v548, %v549
      %s551 = vtos %v550
      %552 = vst [vmem:[#allocation1] ss:$2 sm:$0xff] %v230
      %v553 = vld.sshfl [vmem:[#allocation1] sm:$0xff pattern:$0x75316420]
      %v554 = vld.sshfl [vmem:[#allocation1 + $0x8] sm:$0xff pattern:$0x75316420]
      %v557 = vsel %vm324, %v553, 0.0
      %v558 = vsel %vm324, %v554, 0.0
      %v559 = vadd.f32 %v557, %v558
      %560 = vadd.xlane.f32.xlu0 %v559
      %v561 = vpop.xlane.xlu0 %560
      %v562 = vrot.slane %v561, 4
      %v563 = vadd.f32 %v561, %v562
      %v564 = vrot.slane %v563, 2
      %v565 = vadd.f32 %v563, %v564
      %v566 = vrot.slane %v565, 1
      %v567 = vadd.f32 %v565, %v566
      %s568 = vtos %v567
      %v569 = vmul.f32 %v269, %v230
      %571 = vst [vmem:[#allocation1] ss:$2 sm:$0xff] %v569
      %v572 = vld.sshfl [vmem:[#allocation1] sm:$0xff pattern:$0x75316420]
      %v573 = vld.sshfl [vmem:[#allocation1 + $0x8] sm:$0xff pattern:$0x75316420]
      %v576 = vsel %vm324, %v572, 0.0
      %v577 = vsel %vm324, %v573, 0.0
      %v578 = vadd.f32 %v576, %v577
      %579 = vadd.xlane.f32.xlu0 %v578
      %v580 = vpop.xlane.xlu0 %579
      %v581 = vrot.slane %v580, 4
      %v582 = vadd.f32 %v580, %v581
      %v583 = vrot.slane %v582, 2
      %v584 = vadd.f32 %v582, %v583
      %v585 = vrot.slane %v584, 1
      %v586 = vadd.f32 %v584, %v585
      %s587 = vtos %v586
      %s588 = ssub.f32 %s568, %s587
      %589 = vst [vmem:[#allocation1] ss:$2 sm:$0xff] %v269
      %v590 = vld.sshfl [vmem:[#allocation1] sm:$0xff pattern:$0x75316420]
      %v591 = vld.sshfl [vmem:[#allocation1 + $0x8] sm:$0xff pattern:$0x75316420]
      %v594 = vsel %vm324, %v590, 0.0
      %v595 = vsel %vm324, %v591, 0.0
      %v596 = vadd.f32 %v594, %v595
      %597 = vadd.xlane.f32.xlu0 %v596
      %v598 = vpop.xlane.xlu0 %597
      %v599 = vrot.slane %v598, 4
      %v600 = vadd.f32 %v598, %v599
      %v601 = vrot.slane %v600, 2
      %v602 = vadd.f32 %v600, %v601
      %v603 = vrot.slane %v602, 1
      %v604 = vadd.f32 %v602, %v603
      %s605 = vtos %v604
      %s606 = ssub.f32 1024.0, %s605
      %v607 = vlaneseq
      %v608 = vand.u32 %v607, 127
      %vm609 = vcmp.eq.s32.totalorder %v608, 0
      %v610 = vstv %s515
      %v611 = vsel %vm609, %v610, 0.0
      %vm612 = vcmp.eq.s32.totalorder %v608, 1
      %v613 = vstv %s533
      %v614 = vsel %vm612, %v613, 0.0
      %v615 = vadd.f32 %v611, %v614
      %vm616 = vcmp.eq.s32.totalorder %v608, 2
      %v617 = vstv %s551
      %v618 = vsel %vm616, %v617, 0.0
      %v619 = vadd.f32 %v615, %v618
      %vm620 = vcmp.eq.s32.totalorder %v608, 3
      %v621 = vstv %s588
      %v622 = vsel %vm620, %v621, 0.0
      %v623 = vadd.f32 %v619, %v622
      %vm624 = vcmp.eq.s32.totalorder %v608, 4
      %v625 = vstv %s606
      %v626 = vsel %vm624, %v625, 0.0
      %v627 = vadd.f32 %v623, %v626
      %vm628 = vcmp.eq.s32.totalorder %v608, 5
      %v629 = vstv %s568
      %v630 = vsel %vm628, %v629, 0.0
      %v631 = vadd.f32 %v627, %v630
      %p632 = scmp.eq.s32.totalorder %s19, 0
      // Predicated region
      $region33: #{_boundary_dice_impl.1} parent=31 // pred_check
        %p633 = pneg %p632
      $region34: #{_boundary_dice_impl.1} parent=31 // pred_check_branch
        %635 = sbr.rel (%p633) target = $region36
      $region35: #{_boundary_dice_impl.1} parent=31 // pred_region
        %636 = vst [vmem:[%s228] sm:$0xff] %v631
      $region36: #{_boundary_dice_impl.1} parent=31 // pred_fallthru
        _
      %p637 = scmp.gt.s32.totalorder %s19, 0
      // Predicated region
      $region37: #{_boundary_dice_impl.1} parent=31 // pred_check
        %p638 = pneg %p637
      $region38: #{_boundary_dice_impl.1} parent=31 // pred_check_branch
        %640 = sbr.rel (%p638) target = $region40
      $region39: #{_boundary_dice_impl.1} parent=31 // pred_region
        %v641 = vld [vmem:[%s228] sm:$0xff]
        %v642 = vadd.f32 %v641, %v631
        %643 = vst [vmem:[%s228] sm:$0xff] %v642
      $region40: #{_boundary_dice_impl.1} parent=31 // pred_fallthru
        _
      %p644 = scmp.lt.s32.totalorder %s18, 1
      %s645 = scalar_select %p644, %s18, 1
      %s646 = smul.addr %s645, 8
      %s647 = scalar_lea.vmem %s3, %s646
      // Predicated region
      $region41: #{_boundary_dice_impl.1} parent=31 // pred_check
        %p648 = pneg %p121
      $region42: #{_boundary_dice_impl.1} parent=31 // pred_check_branch
        %650 = sbr.rel (%p648) target = $region44
      $region43: #{_boundary_dice_impl.1} parent=31 // pred_region
        _
      $region44: #{_boundary_dice_impl.1} parent=31 // pred_fallthru
        _
    $region32: #{_boundary_dice_impl.1} parent=5 // pred_fallthru
      _
    %p651 = scmp.le.s32.totalorder 2, %s9
    // Predicated region
    $region45: #{_boundary_dice_impl.1} parent=5 // pred_check
      %p652 = pneg %p651
    $region46: #{_boundary_dice_impl.1} parent=5 // pred_check_branch
      %654 = sbr.rel (%p652) target = $region48
    $region47: #{_boundary_dice_impl.1} parent=5 // pred_region
      %s655 = ssub.s32 %s9, 2
      // Predicated region
      $region49: #{_boundary_dice_impl.1} parent=47 // pred_check
        %p656 = pneg %p127
      $region50: #{_boundary_dice_impl.1} parent=47 // pred_check_branch
        %658 = sbr.rel (%p656) target = $region52
      $region51: #{_boundary_dice_impl.1} parent=47 // pred_region
        %p659 = scmp.lt.s32.totalorder %s20, 1
        %s660 = scalar_select %p659, %s20, 1
        %s661 = smul.addr %s660, 8
        %s662 = scalar_lea.vmem %s3, %s661
      $region52: #{_boundary_dice_impl.1} parent=47 // pred_fallthru
        _
    $region48: #{_boundary_dice_impl.1} parent=5 // pred_fallthru
      _
  $region6: #{_boundary_dice_impl.1} parent=0 // loop_footer
    %s13 = sadd.s32 1, %s9
  $region7: #{_boundary_dice_impl.1} parent=0 // loop_footer_branch
    %8 = sbr.rel target = $region3
  $region8: #{_boundary_dice_impl.1} parent=0 // loop_exit
    _

</llo_original>
